<compile_context>
chip_gen: v7x
topology: tpu7x:2x2x1
jax: 0.10.0
libtpu: 0.0.40
codegen_flags: <defaults>
</compile_context>

<pallas_src>
import functools

import jax
import jax.numpy as jnp
from jax.experimental import pallas as pl
from jax.experimental.pallas import tpu as pltpu


# ------------------------- Pallas recurrence kernel ------------------------ #

def _lstm_seq_kernel(*refs, TQ, B, H, ndirs, unroll, matmul_dtype):
    """One time-chunk of the LSTM recurrence, both directions fused on batch.

    Inputs  : pre_f (TQ,B,4H) [, pre_r (TQ,B,4H) mirror chunk], whh (DH,4H)
    Outputs : out_f (TQ,B,H) [, out_r (TQ,B,H) mirror chunk], hT (B,DH), cT (B,DH)
    Scratch : h_sc (DB,DH) block-structured hidden (carried), c_sc (DB,H)
    Gate column order is (i, f, o, g) -> one sigmoid pass + one tanh pass.
    """
    if ndirs == 2:
        (pre_f_ref, pre_r_ref, whh_ref,
         out_f_ref, out_r_ref, hT_ref, cT_ref, h_sc, c_sc) = refs
    else:
        (pre_f_ref, whh_ref, out_f_ref, hT_ref, cT_ref, h_sc, c_sc) = refs

    t = pl.program_id(0)

    @pl.when(t == 0)
    def _init():
        # Zero once; off-diagonal blocks must stay zero for the block-diag
        # recurrent matmul and for hT = h[:B] + h[B:].
        h_sc[...] = jnp.zeros_like(h_sc)
        c_sc[...] = jnp.zeros_like(c_sc)

    whh = whh_ref[...]                       # (DH, 4H), resident for the chunk

    def step(ls, carry):
        # Only the small recurrent matmul lives on the serial path; the input
        # projection was hoisted to one big GEMM per direction in the wrapper.
        if ndirs == 2:
            pre_t = jnp.concatenate(
                [pre_f_ref[ls], pre_r_ref[TQ - 1 - ls]], axis=0)      # (2B,4H)
        else:
            pre_t = pre_f_ref[ls]                                      # (B,4H)

        h_prev = h_sc[...].astype(matmul_dtype)
        gates = pre_t.astype(jnp.float32) + jnp.dot(
            h_prev, whh, preferred_element_type=jnp.float32)           # (DB,4H)

        # Single-pass nonlinearities: sigmoid over contiguous (i,f,o) columns,
        # tanh only over the g column.
        sig = jax.nn.sigmoid(gates[:, :3 * H])
        g = jnp.tanh(gates[:, 3 * H:])
        i = sig[:, 0 * H:1 * H]
        f = sig[:, 1 * H:2 * H]
        o = sig[:, 2 * H:3 * H]

        c_new = f * c_sc[...] + i * g                                  # (DB,H)
        h_new = o * jnp.tanh(c_new)                                    # (DB,H)
        c_sc[...] = c_new

        if ndirs == 2:
            # Static sub-block stores (no masked where/concat scatter).
            h_sc[:B, :H] = h_new[:B]
            h_sc[B:, H:] = h_new[B:]
            out_f_ref[ls] = h_new[:B]
            out_r_ref[TQ - 1 - ls] = h_new[B:]      # un-reverse via mirror chunk
        else:
            h_sc[...] = h_new
            out_f_ref[ls] = h_new
        return carry

    jax.lax.fori_loop(0, TQ, step, 0, unroll=unroll)

    @pl.when(t == pl.num_programs(0) - 1)
    def _finalize():
        if ndirs == 2:
            hT_ref[...] = h_sc[:B, :] + h_sc[B:, :]        # off-blocks are zero
            cT_ref[...] = jnp.concatenate([c_sc[:B], c_sc[B:]], axis=-1)
        else:
            hT_ref[...] = h_sc[...]
            cT_ref[...] = c_sc[...]


def _reorder_gates_ifog(w, H):
    """Reorder the last-dim gate blocks from (i, f, g, o) to (i, f, o, g)."""
    return jnp.concatenate(
        [w[..., 0:H], w[..., H:2 * H], w[..., 3 * H:4 * H], w[..., 2 * H:3 * H]],
        axis=-1)


def _vmem_limit_bytes(TQ, B, H, ndirs):
    """Explicit VMEM budget: 2x double-buffered chunk I/O + residents, with
    headroom; capped at 64 MiB so the same sizing also fits v7x."""
    f32 = 4
    pre_blk = TQ * B * 4 * H * f32
    out_blk = TQ * B * H * f32
    resident = (ndirs * H) * 4 * H * f32 + 2 * (B * ndirs * H) * f32
    scratch = (ndirs * B) * (ndirs * H) * f32 + (ndirs * B) * H * f32
    need = ndirs * 2 * (pre_blk + out_blk) + 2 * resident + scratch
    return int(min(max(2 * need, 16 << 20), 64 << 20))


def lstm_layer_fused(x, layer_params, *, bidirectional, time_chunk=8,
                     matmul_dtype=jnp.float32):
    """One LSTM layer (both directions) as a single time-chunked Pallas call.

    x: (T, B, In) f32; layer_params: [(W_ih, W_hh, b)] per direction, gate
    order (i, f, g, o).  Returns (outputs (T,B,ndirs*H), h_T, c_T).
    """
    T, B, _ = x.shape
    ndirs = 2 if bidirectional else 1
    H = layer_params[0][1].shape[0]
    DB, DH = ndirs * B, ndirs * H

    # Largest time-chunk size <= time_chunk that divides T.
    TQ = min(time_chunk, T)
    while T % TQ != 0:
        TQ -= 1
    n_chunks = T // TQ

    # ---- Hoisted input projection: one big GEMM per direction over all T ----
    # Gate columns reordered to (i, f, o, g) for single-pass nonlinearities.
    pres, whhs = [], []
    for (wih, whh, b) in layer_params:
        wih_r = _reorder_gates_ifog(wih, H)
        b_r = _reorder_gates_ifog(b, H)
        whhs.append(_reorder_gates_ifog(whh, H))
        pres.append(
            (jnp.einsum('tbi,ij->tbj', x, wih_r) + b_r).astype(matmul_dtype))
    whh_stack = jnp.concatenate(whhs, axis=0).astype(matmul_dtype)   # (DH, 4H)

    in_arrays = [pres[0]]
    in_specs = [pl.BlockSpec((TQ, B, 4 * H), lambda t: (t, 0, 0))]
    if ndirs == 2:
        in_arrays.append(pres[1])
        # Reverse direction reads its mirror time chunk (reversal in index_map,
        # no wrapper-side reverse/concat materialization).
        in_specs.append(
            pl.BlockSpec((TQ, B, 4 * H), lambda t: (n_chunks - 1 - t, 0, 0)))
    in_arrays.append(whh_stack)
    in_specs.append(pl.BlockSpec((DH, 4 * H), lambda t: (0, 0)))

    out_shapes = [jax.ShapeDtypeStruct((T, B, H), jnp.float32)]
    out_specs = [pl.BlockSpec((TQ, B, H), lambda t: (t, 0, 0))]
    if ndirs == 2:
        out_shapes.append(jax.ShapeDtypeStruct((T, B, H), jnp.float32))
        out_specs.append(
            pl.BlockSpec((TQ, B, H), lambda t: (n_chunks - 1 - t, 0, 0)))
    out_shapes += [jax.ShapeDtypeStruct((B, DH), jnp.float32),
                   jax.ShapeDtypeStruct((B, DH), jnp.float32)]
    out_specs += [pl.BlockSpec((B, DH), lambda t: (0, 0)),
                  pl.BlockSpec((B, DH), lambda t: (0, 0))]

    kernel = functools.partial(
        _lstm_seq_kernel, TQ=TQ, B=B, H=H, ndirs=ndirs,
        unroll=min(TQ, 8), matmul_dtype=matmul_dtype)

    results = pl.pallas_call(
        kernel,
        out_shape=tuple(out_shapes),
        grid_spec=pltpu.PrefetchScalarGridSpec(
            num_scalar_prefetch=0,
            grid=(n_chunks,),                    # time chunks, sequential carry
            in_specs=in_specs,
            out_specs=out_specs,
            scratch_shapes=[
                pltpu.VMEM((DB, DH), jnp.float32),   # block-structured hidden
                pltpu.VMEM((DB, H), jnp.float32),    # cell state
            ],
        ),
        compiler_params=pltpu.CompilerParams(
            dimension_semantics=("arbitrary",),      # recurrence => sequential
            vmem_limit_bytes=_vmem_limit_bytes(TQ, B, H, ndirs),
        ),
    )(*in_arrays)

    if ndirs == 2:
        out_f, out_r, hT, cT = results
        out = jnp.concatenate([out_f, out_r], axis=-1)   # (T, B, 2H)
    else:
        out, hT, cT = results
    return out, hT, cT


# ------------------------------ Encoder glue ------------------------------ #

def init_encoder_params(key, input_dim, emb_dim, hid_dim, n_layers,
                        bidirectional):
    """Deterministic parameter init (PyTorch-like shapes, uniform(-k, k))."""
    params = {}
    key, ek = jax.random.split(key)
    params["embedding"] = jax.random.normal(
        ek, (input_dim, emb_dim), dtype=jnp.float32)

    k = 1.0 / jnp.sqrt(jnp.float32(hid_dim))
    num_dirs = 2 if bidirectional else 1
    lstm = {}
    for layer in range(n_layers):
        in_dim = emb_dim if layer == 0 else num_dirs * hid_dim
        for d in range(num_dirs):
            key, k1, k2, k3, k4 = jax.random.split(key, 5)
            wih = jax.random.uniform(k1, (in_dim, 4 * hid_dim),
                                     minval=-k, maxval=k, dtype=jnp.float32)
            whh = jax.random.uniform(k2, (hid_dim, 4 * hid_dim),
                                     minval=-k, maxval=k, dtype=jnp.float32)
            b_ih = jax.random.uniform(k3, (4 * hid_dim,),
                                      minval=-k, maxval=k, dtype=jnp.float32)
            b_hh = jax.random.uniform(k4, (4 * hid_dim,),
                                      minval=-k, maxval=k, dtype=jnp.float32)
            lstm[(layer, d)] = (wih, whh, (b_ih + b_hh)[None, :])
    params["lstm"] = lstm
    return params


def encoder_forward(src, params, *, n_layers, bidirectional, use_pallas=True,
                    time_chunk=4, matmul_dtype=jnp.float32):
    """Mirrors Encoder.forward: returns (outputs, hidden[-1], cell[-1])."""
    num_dirs = 2 if bidirectional else 1
    # Embedding lookup (glue).
    x = jnp.take(params["embedding"], src, axis=0)          # (T, B, E)
    # TODO(synk): training-mode dropout mask omitted; eval semantics (identity).

    h_last = c_last = None
    for layer in range(n_layers):
        layer_params = [params["lstm"][(layer, d)] for d in range(num_dirs)]
        if use_pallas:
            x, h_last, c_last = lstm_layer_fused(
                x, layer_params, bidirectional=bidirectional,
                time_chunk=time_chunk, matmul_dtype=matmul_dtype)
        else:
            x, h_last, c_last = _lstm_layer_ref(
                x, layer_params, bidirectional=bidirectional)

    # outputs: (T, B, num_dirs*H); hidden[-1]/cell[-1]: (B, num_dirs*H)
    return x, h_last, c_last


# --------------------------- Pure-JAX reference ---------------------------- #

def _lstm_dir_ref(x, wih, whh, b, *, reverse):
    T, B, _ = x.shape
    H = whh.shape[0]

    def step(carry, xt):
        h, c = carry
        gates = xt @ wih + h @ whh + b[0]
        i = jax.nn.sigmoid(gates[:, :H])
        f = jax.nn.sigmoid(gates[:, H:2 * H])
        g = jnp.tanh(gates[:, 2 * H:3 * H])
        o = jax.nn.sigmoid(gates[:, 3 * H:])
        c = f * c + i * g
        h = o * jnp.tanh(c)
        return (h, c), h

    xs = x[::-1] if reverse else x
    init = (jnp.zeros((B, H), jnp.float32), jnp.zeros((B, H), jnp.float32))
    (hT, cT), ys = jax.lax.scan(step, init, xs)
    ys = ys[::-1] if reverse else ys
    return ys, hT, cT


def _lstm_layer_ref(x, layer_params, *, bidirectional):
    outs, hs, cs = [], [], []
    for d, (wih, whh, b) in enumerate(layer_params):
        o, h, c = _lstm_dir_ref(x, wih, whh, b, reverse=(d == 1))
        outs.append(o)
        hs.append(h)
        cs.append(c)
    if bidirectional:
        return (jnp.concatenate(outs, axis=-1),
                jnp.concatenate(hs, axis=-1),
                jnp.concatenate(cs, axis=-1))
    return outs[0], hs[0], cs[0]


# ---------------------------------- main ----------------------------------- #

if __name__ == "__main__":
    # Small, module-consistent config.
    INPUT_DIM = 16     # vocab size
    EMB_DIM = 32
    HID_DIM = 32
    N_LAYERS = 2
    DROPOUT = 0.0      # eval semantics -> identity
    BIDIRECTIONAL = True
    T, B = 8, 4        # (seq_len, batch)
    TIME_CHUNK = 4     # 2 chunks -> exercises the carried-scratch grid path

    key = jax.random.PRNGKey(0)
    key, pkey, skey = jax.random.split(key, 3)

    params = init_encoder_params(pkey, INPUT_DIM, EMB_DIM, HID_DIM,
                                 N_LAYERS, BIDIRECTIONAL)
    src = jax.random.randint(skey, (T, B), 0, INPUT_DIM, dtype=jnp.int32)

    fwd = functools.partial(encoder_forward, n_layers=N_LAYERS,
                            bidirectional=BIDIRECTIONAL,
                            time_chunk=TIME_CHUNK)

    outputs, hidden, cell = jax.block_until_ready(
        jax.jit(lambda s: fwd(s, params, use_pallas=True))(src))

    # Cross-check against a pure-JAX reference of the same math.
    ref_out, ref_h, ref_c = jax.block_until_ready(
        jax.jit(lambda s: fwd(s, params, use_pallas=False))(src))

    assert outputs.shape == (T, B, 2 * HID_DIM)
    assert hidden.shape == (B, 2 * HID_DIM)
    assert cell.shape == (B, 2 * HID_DIM)
    assert jnp.allclose(outputs, ref_out, atol=1e-5, rtol=1e-5)
    assert jnp.allclose(hidden, ref_h, atol=1e-5, rtol=1e-5)
    assert jnp.allclose(cell, ref_c, atol=1e-5, rtol=1e-5)

    print("KERNEL_OK")
</pallas_src>

<mosaic_0001>
module attributes {stable_mosaic.version = 11 : i64} {
  func.func @_lstm_seq_kernel(%arg0: i32, %arg1: memref<4x4x128xf32, #tpu.memory_space<vmem>>, %arg2: memref<4x4x128xf32, #tpu.memory_space<vmem>>, %arg3: memref<64x128xf32, #tpu.memory_space<vmem>>, %arg4: memref<4x4x32xf32, #tpu.memory_space<vmem>>, %arg5: memref<4x4x32xf32, #tpu.memory_space<vmem>>, %arg6: memref<4x64xf32, #tpu.memory_space<vmem>>, %arg7: memref<4x64xf32, #tpu.memory_space<vmem>>, %arg8: memref<8x64xf32, #tpu.memory_space<vmem>>, %arg9: memref<8x32xf32, #tpu.memory_space<vmem>>) attributes {dimension_semantics = [#tpu.dimension_semantics<arbitrary>], iteration_bounds = array<i64: 2>, scalar_prefetch = 0 : i64, scratch_operands = 2 : i64, tpu.core_type = #tpu.core_type<tc>, window_params = [{transform_indices = @transform_0, window_bounds = array<i64: 4, 4, 128>}, {transform_indices = @transform_1, window_bounds = array<i64: 4, 4, 128>}, {pipeline_mode = #tpu.pipeline_mode<synchronous>, transform_indices = @transform_2, window_bounds = array<i64: 64, 128>}, {transform_indices = @transform_3, window_bounds = array<i64: 4, 4, 32>}, {transform_indices = @transform_4, window_bounds = array<i64: 4, 4, 32>}, {pipeline_mode = #tpu.pipeline_mode<synchronous>, transform_indices = @transform_5, window_bounds = array<i64: 4, 64>}, {pipeline_mode = #tpu.pipeline_mode<synchronous>, transform_indices = @transform_6, window_bounds = array<i64: 4, 64>}]} {
    %c0_i32 = arith.constant 0 : i32
    %0 = arith.cmpi eq, %arg0, %c0_i32 : i32
    %1 = arith.extui %0 : i1 to i32
    %c0_i32_0 = arith.constant 0 : i32
    %2 = arith.cmpi ne, %1, %c0_i32_0 : i32
    scf.if %2 {
      %cst_90 = arith.constant 0.000000e+00 : f32
      %183 = vector.broadcast %cst_90 : f32 to vector<8x64xf32>
      %c0_91 = arith.constant 0 : index
      %c0_92 = arith.constant 0 : index
      %184 = vector.load %arg8[%c0_91, %c0_92] : memref<8x64xf32, #tpu.memory_space<vmem>>, vector<8x64xf32>
      tpu.vector_store %arg8[%c0_91, %c0_92], %183 {strides = array<i32>} : memref<8x64xf32, #tpu.memory_space<vmem>>, vector<8x64xf32>,
      %cst_93 = arith.constant 0.000000e+00 : f32
      %185 = vector.broadcast %cst_93 : f32 to vector<8x32xf32>
      %c0_94 = arith.constant 0 : index
      %c0_95 = arith.constant 0 : index
      %186 = vector.load %arg9[%c0_94, %c0_95] : memref<8x32xf32, #tpu.memory_space<vmem>>, vector<8x32xf32>
      tpu.vector_store %arg9[%c0_94, %c0_95], %185 {strides = array<i32>} : memref<8x32xf32, #tpu.memory_space<vmem>>, vector<8x32xf32>,
    } else {
    }
    %c0 = arith.constant 0 : index
    %c0_1 = arith.constant 0 : index
    %3 = vector.load %arg3[%c0, %c0_1] : memref<64x128xf32, #tpu.memory_space<vmem>>, vector<64x128xf32>
    %c0_i32_2 = arith.constant 0 : i32
    %4 = arith.index_cast %c0_i32_2 : i32 to index
    %c0_3 = arith.constant 0 : index
    %c0_4 = arith.constant 0 : index
    %5 = vector.load %arg1[%4, %c0_3, %c0_4] : memref<4x4x128xf32, #tpu.memory_space<vmem>>, vector<1x4x128xf32>
    %6 = vector.shape_cast %5 : vector<1x4x128xf32> to vector<4x128xf32>
    %c3_i32 = arith.constant 3 : i32
    %7 = arith.subi %c3_i32, %c0_i32_2 : i32
    %8 = arith.index_cast %7 : i32 to index
    %c0_5 = arith.constant 0 : index
    %c0_6 = arith.constant 0 : index
    %9 = vector.load %arg2[%8, %c0_5, %c0_6] : memref<4x4x128xf32, #tpu.memory_space<vmem>>, vector<1x4x128xf32>
    %10 = vector.shape_cast %9 : vector<1x4x128xf32> to vector<4x128xf32>
    %11 = tpu.concatenate %6, %10 in 0 : vector<4x128xf32>, vector<4x128xf32> -> vector<8x128xf32>
    %c0_7 = arith.constant 0 : index
    %c0_8 = arith.constant 0 : index
    %12 = vector.load %arg8[%c0_7, %c0_8] : memref<8x64xf32, #tpu.memory_space<vmem>>, vector<8x64xf32>
    %cst = arith.constant dense<0.000000e+00> : vector<8x128xf32>
    %13 = tpu.matmul %12, %3, %cst {dimension_numbers = #tpu.dot_dimension_numbers<[1], [0], [0], [1], [0, 0, 1, 1], [], []>} : vector<8x64xf32>, vector<64x128xf32>, vector<8x128xf32> -> vector<8x128xf32>
    %14 = arith.addf %11, %13 : vector<8x128xf32>
    %15 = vector.extract_strided_slice %14 {offsets = [0, 0], sizes = [8, 96], strides = [1, 1]} : vector<8x128xf32> to vector<8x96xf32>
    %16 = arith.negf %15 : vector<8x96xf32>
    %17 = math.exp %16 : vector<8x96xf32>
    %cst_9 = arith.constant 1.000000e+00 : f32
    %18 = vector.broadcast %cst_9 : f32 to vector<8x96xf32>
    %19 = arith.addf %18, %17 : vector<8x96xf32>
    %20 = arith.divf %18, %19 : vector<8x96xf32>
    %21 = vector.extract_strided_slice %14 {offsets = [0, 96], sizes = [8, 32], strides = [1, 1]} : vector<8x128xf32> to vector<8x32xf32>
    %22 = math.tanh %21 : vector<8x32xf32>
    %23 = vector.extract_strided_slice %20 {offsets = [0, 0], sizes = [8, 32], strides = [1, 1]} : vector<8x96xf32> to vector<8x32xf32>
    %24 = vector.extract_strided_slice %20 {offsets = [0, 32], sizes = [8, 32], strides = [1, 1]} : vector<8x96xf32> to vector<8x32xf32>
    %25 = vector.extract_strided_slice %20 {offsets = [0, 64], sizes = [8, 32], strides = [1, 1]} : vector<8x96xf32> to vector<8x32xf32>
    %c0_10 = arith.constant 0 : index
    %c0_11 = arith.constant 0 : index
    %26 = vector.load %arg9[%c0_10, %c0_11] : memref<8x32xf32, #tpu.memory_space<vmem>>, vector<8x32xf32>
    %27 = arith.mulf %24, %26 : vector<8x32xf32>
    %28 = arith.mulf %23, %22 : vector<8x32xf32>
    %29 = arith.addf %27, %28 : vector<8x32xf32>
    %30 = math.tanh %29 : vector<8x32xf32>
    %31 = arith.mulf %25, %30 : vector<8x32xf32>
    %c0_12 = arith.constant 0 : index
    %c0_13 = arith.constant 0 : index
    %32 = vector.load %arg9[%c0_12, %c0_13] : memref<8x32xf32, #tpu.memory_space<vmem>>, vector<8x32xf32>
    tpu.vector_store %arg9[%c0_12, %c0_13], %29 {strides = array<i32>} : memref<8x32xf32, #tpu.memory_space<vmem>>, vector<8x32xf32>,
    %33 = vector.extract_strided_slice %31 {offsets = [0, 0], sizes = [4, 32], strides = [1, 1]} : vector<8x32xf32> to vector<4x32xf32>
    %c0_14 = arith.constant 0 : index
    %c0_15 = arith.constant 0 : index
    %34 = vector.load %arg8[%c0_14, %c0_15] : memref<8x64xf32, #tpu.memory_space<vmem>>, vector<4x32xf32>
    tpu.vector_store %arg8[%c0_14, %c0_15], %33 {strides = array<i32>} : memref<8x64xf32, #tpu.memory_space<vmem>>, vector<4x32xf32>,
    %35 = vector.extract_strided_slice %31 {offsets = [4, 0], sizes = [4, 32], strides = [1, 1]} : vector<8x32xf32> to vector<4x32xf32>
    %c4 = arith.constant 4 : index
    %c32 = arith.constant 32 : index
    %36 = vector.load %arg8[%c4, %c32] : memref<8x64xf32, #tpu.memory_space<vmem>>, vector<4x32xf32>
    tpu.vector_store %arg8[%c4, %c32], %35 {strides = array<i32>} : memref<8x64xf32, #tpu.memory_space<vmem>>, vector<4x32xf32>,
    %37 = vector.extract_strided_slice %31 {offsets = [0, 0], sizes = [4, 32], strides = [1, 1]} : vector<8x32xf32> to vector<4x32xf32>
    %38 = arith.index_cast %c0_i32_2 : i32 to index
    %c0_16 = arith.constant 0 : index
    %c0_17 = arith.constant 0 : index
    %39 = vector.load %arg4[%38, %c0_16, %c0_17] : memref<4x4x32xf32, #tpu.memory_space<vmem>>, vector<1x4x32xf32>
    %40 = vector.shape_cast %39 : vector<1x4x32xf32> to vector<4x32xf32>
    %41 = vector.shape_cast %37 : vector<4x32xf32> to vector<1x4x32xf32>
    tpu.vector_store %arg4[%38, %c0_16, %c0_17], %41 {strides = array<i32>} : memref<4x4x32xf32, #tpu.memory_space<vmem>>, vector<1x4x32xf32>,
    %42 = vector.extract_strided_slice %31 {offsets = [4, 0], sizes = [4, 32], strides = [1, 1]} : vector<8x32xf32> to vector<4x32xf32>
    %c3_i32_18 = arith.constant 3 : i32
    %43 = arith.subi %c3_i32_18, %c0_i32_2 : i32
    %44 = arith.index_cast %43 : i32 to index
    %c0_19 = arith.constant 0 : index
    %c0_20 = arith.constant 0 : index
    %45 = vector.load %arg5[%44, %c0_19, %c0_20] : memref<4x4x32xf32, #tpu.memory_space<vmem>>, vector<1x4x32xf32>
    %46 = vector.shape_cast %45 : vector<1x4x32xf32> to vector<4x32xf32>
    %47 = vector.shape_cast %42 : vector<4x32xf32> to vector<1x4x32xf32>
    tpu.vector_store %arg5[%44, %c0_19, %c0_20], %47 {strides = array<i32>} : memref<4x4x32xf32, #tpu.memory_space<vmem>>, vector<1x4x32xf32>,
    %c1_i32 = arith.constant 1 : i32
    %48 = arith.index_cast %c1_i32 : i32 to index
    %c0_21 = arith.constant 0 : index
    %c0_22 = arith.constant 0 : index
    %49 = vector.load %arg1[%48, %c0_21, %c0_22] : memref<4x4x128xf32, #tpu.memory_space<vmem>>, vector<1x4x128xf32>
    %50 = vector.shape_cast %49 : vector<1x4x128xf32> to vector<4x128xf32>
    %c3_i32_23 = arith.constant 3 : i32
    %51 = arith.subi %c3_i32_23, %c1_i32 : i32
    %52 = arith.index_cast %51 : i32 to index
    %c0_24 = arith.constant 0 : index
    %c0_25 = arith.constant 0 : index
    %53 = vector.load %arg2[%52, %c0_24, %c0_25] : memref<4x4x128xf32, #tpu.memory_space<vmem>>, vector<1x4x128xf32>
    %54 = vector.shape_cast %53 : vector<1x4x128xf32> to vector<4x128xf32>
    %55 = tpu.concatenate %50, %54 in 0 : vector<4x128xf32>, vector<4x128xf32> -> vector<8x128xf32>
    %c0_26 = arith.constant 0 : index
    %c0_27 = arith.constant 0 : index
    %56 = vector.load %arg8[%c0_26, %c0_27] : memref<8x64xf32, #tpu.memory_space<vmem>>, vector<8x64xf32>
    %cst_28 = arith.constant dense<0.000000e+00> : vector<8x128xf32>
    %57 = tpu.matmul %56, %3, %cst_28 {dimension_numbers = #tpu.dot_dimension_numbers<[1], [0], [0], [1], [0, 0, 1, 1], [], []>} : vector<8x64xf32>, vector<64x128xf32>, vector<8x128xf32> -> vector<8x128xf32>
    %58 = arith.addf %55, %57 : vector<8x128xf32>
    %59 = vector.extract_strided_slice %58 {offsets = [0, 0], sizes = [8, 96], strides = [1, 1]} : vector<8x128xf32> to vector<8x96xf32>
    %60 = arith.negf %59 : vector<8x96xf32>
    %61 = math.exp %60 : vector<8x96xf32>
    %cst_29 = arith.constant 1.000000e+00 : f32
    %62 = vector.broadcast %cst_29 : f32 to vector<8x96xf32>
    %63 = arith.addf %62, %61 : vector<8x96xf32>
    %64 = arith.divf %62, %63 : vector<8x96xf32>
    %65 = vector.extract_strided_slice %58 {offsets = [0, 96], sizes = [8, 32], strides = [1, 1]} : vector<8x128xf32> to vector<8x32xf32>
    %66 = math.tanh %65 : vector<8x32xf32>
    %67 = vector.extract_strided_slice %64 {offsets = [0, 0], sizes = [8, 32], strides = [1, 1]} : vector<8x96xf32> to vector<8x32xf32>
    %68 = vector.extract_strided_slice %64 {offsets = [0, 32], sizes = [8, 32], strides = [1, 1]} : vector<8x96xf32> to vector<8x32xf32>
    %69 = vector.extract_strided_slice %64 {offsets = [0, 64], sizes = [8, 32], strides = [1, 1]} : vector<8x96xf32> to vector<8x32xf32>
    %c0_30 = arith.constant 0 : index
    %c0_31 = arith.constant 0 : index
    %70 = vector.load %arg9[%c0_30, %c0_31] : memref<8x32xf32, #tpu.memory_space<vmem>>, vector<8x32xf32>
    %71 = arith.mulf %68, %70 : vector<8x32xf32>
    %72 = arith.mulf %67, %66 : vector<8x32xf32>
    %73 = arith.addf %71, %72 : vector<8x32xf32>
    %74 = math.tanh %73 : vector<8x32xf32>
    %75 = arith.mulf %69, %74 : vector<8x32xf32>
    %c0_32 = arith.constant 0 : index
    %c0_33 = arith.constant 0 : index
    %76 = vector.load %arg9[%c0_32, %c0_33] : memref<8x32xf32, #tpu.memory_space<vmem>>, vector<8x32xf32>
    tpu.vector_store %arg9[%c0_32, %c0_33], %73 {strides = array<i32>} : memref<8x32xf32, #tpu.memory_space<vmem>>, vector<8x32xf32>,
    %77 = vector.extract_strided_slice %75 {offsets = [0, 0], sizes = [4, 32], strides = [1, 1]} : vector<8x32xf32> to vector<4x32xf32>
    %c0_34 = arith.constant 0 : index
    %c0_35 = arith.constant 0 : index
    %78 = vector.load %arg8[%c0_34, %c0_35] : memref<8x64xf32, #tpu.memory_space<vmem>>, vector<4x32xf32>
    tpu.vector_store %arg8[%c0_34, %c0_35], %77 {strides = array<i32>} : memref<8x64xf32, #tpu.memory_space<vmem>>, vector<4x32xf32>,
    %79 = vector.extract_strided_slice %75 {offsets = [4, 0], sizes = [4, 32], strides = [1, 1]} : vector<8x32xf32> to vector<4x32xf32>
    %c4_36 = arith.constant 4 : index
    %c32_37 = arith.constant 32 : index
    %80 = vector.load %arg8[%c4_36, %c32_37] : memref<8x64xf32, #tpu.memory_space<vmem>>, vector<4x32xf32>
    tpu.vector_store %arg8[%c4_36, %c32_37], %79 {strides = array<i32>} : memref<8x64xf32, #tpu.memory_space<vmem>>, vector<4x32xf32>,
    %81 = vector.extract_strided_slice %75 {offsets = [0, 0], sizes = [4, 32], strides = [1, 1]} : vector<8x32xf32> to vector<4x32xf32>
    %82 = arith.index_cast %c1_i32 : i32 to index
    %c0_38 = arith.constant 0 : index
    %c0_39 = arith.constant 0 : index
    %83 = vector.load %arg4[%82, %c0_38, %c0_39] : memref<4x4x32xf32, #tpu.memory_space<vmem>>, vector<1x4x32xf32>
    %84 = vector.shape_cast %83 : vector<1x4x32xf32> to vector<4x32xf32>
    %85 = vector.shape_cast %81 : vector<4x32xf32> to vector<1x4x32xf32>
    tpu.vector_store %arg4[%82, %c0_38, %c0_39], %85 {strides = array<i32>} : memref<4x4x32xf32, #tpu.memory_space<vmem>>, vector<1x4x32xf32>,
    %86 = vector.extract_strided_slice %75 {offsets = [4, 0], sizes = [4, 32], strides = [1, 1]} : vector<8x32xf32> to vector<4x32xf32>
    %c3_i32_40 = arith.constant 3 : i32
    %87 = arith.subi %c3_i32_40, %c1_i32 : i32
    %88 = arith.index_cast %87 : i32 to index
    %c0_41 = arith.constant 0 : index
    %c0_42 = arith.constant 0 : index
    %89 = vector.load %arg5[%88, %c0_41, %c0_42] : memref<4x4x32xf32, #tpu.memory_space<vmem>>, vector<1x4x32xf32>
    %90 = vector.shape_cast %89 : vector<1x4x32xf32> to vector<4x32xf32>
    %91 = vector.shape_cast %86 : vector<4x32xf32> to vector<1x4x32xf32>
    tpu.vector_store %arg5[%88, %c0_41, %c0_42], %91 {strides = array<i32>} : memref<4x4x32xf32, #tpu.memory_space<vmem>>, vector<1x4x32xf32>,
    %c2_i32 = arith.constant 2 : i32
    %92 = arith.index_cast %c2_i32 : i32 to index
    %c0_43 = arith.constant 0 : index
    %c0_44 = arith.constant 0 : index
    %93 = vector.load %arg1[%92, %c0_43, %c0_44] : memref<4x4x128xf32, #tpu.memory_space<vmem>>, vector<1x4x128xf32>
    %94 = vector.shape_cast %93 : vector<1x4x128xf32> to vector<4x128xf32>
    %c3_i32_45 = arith.constant 3 : i32
    %95 = arith.subi %c3_i32_45, %c2_i32 : i32
    %96 = arith.index_cast %95 : i32 to index
    %c0_46 = arith.constant 0 : index
    %c0_47 = arith.constant 0 : index
    %97 = vector.load %arg2[%96, %c0_46, %c0_47] : memref<4x4x128xf32, #tpu.memory_space<vmem>>, vector<1x4x128xf32>
    %98 = vector.shape_cast %97 : vector<1x4x128xf32> to vector<4x128xf32>
    %99 = tpu.concatenate %94, %98 in 0 : vector<4x128xf32>, vector<4x128xf32> -> vector<8x128xf32>
    %c0_48 = arith.constant 0 : index
    %c0_49 = arith.constant 0 : index
    %100 = vector.load %arg8[%c0_48, %c0_49] : memref<8x64xf32, #tpu.memory_space<vmem>>, vector<8x64xf32>
    %cst_50 = arith.constant dense<0.000000e+00> : vector<8x128xf32>
    %101 = tpu.matmul %100, %3, %cst_50 {dimension_numbers = #tpu.dot_dimension_numbers<[1], [0], [0], [1], [0, 0, 1, 1], [], []>} : vector<8x64xf32>, vector<64x128xf32>, vector<8x128xf32> -> vector<8x128xf32>
    %102 = arith.addf %99, %101 : vector<8x128xf32>
    %103 = vector.extract_strided_slice %102 {offsets = [0, 0], sizes = [8, 96], strides = [1, 1]} : vector<8x128xf32> to vector<8x96xf32>
    %104 = arith.negf %103 : vector<8x96xf32>
    %105 = math.exp %104 : vector<8x96xf32>
    %cst_51 = arith.constant 1.000000e+00 : f32
    %106 = vector.broadcast %cst_51 : f32 to vector<8x96xf32>
    %107 = arith.addf %106, %105 : vector<8x96xf32>
    %108 = arith.divf %106, %107 : vector<8x96xf32>
    %109 = vector.extract_strided_slice %102 {offsets = [0, 96], sizes = [8, 32], strides = [1, 1]} : vector<8x128xf32> to vector<8x32xf32>
    %110 = math.tanh %109 : vector<8x32xf32>
    %111 = vector.extract_strided_slice %108 {offsets = [0, 0], sizes = [8, 32], strides = [1, 1]} : vector<8x96xf32> to vector<8x32xf32>
    %112 = vector.extract_strided_slice %108 {offsets = [0, 32], sizes = [8, 32], strides = [1, 1]} : vector<8x96xf32> to vector<8x32xf32>
    %113 = vector.extract_strided_slice %108 {offsets = [0, 64], sizes = [8, 32], strides = [1, 1]} : vector<8x96xf32> to vector<8x32xf32>
    %c0_52 = arith.constant 0 : index
    %c0_53 = arith.constant 0 : index
    %114 = vector.load %arg9[%c0_52, %c0_53] : memref<8x32xf32, #tpu.memory_space<vmem>>, vector<8x32xf32>
    %115 = arith.mulf %112, %114 : vector<8x32xf32>
    %116 = arith.mulf %111, %110 : vector<8x32xf32>
    %117 = arith.addf %115, %116 : vector<8x32xf32>
    %118 = math.tanh %117 : vector<8x32xf32>
    %119 = arith.mulf %113, %118 : vector<8x32xf32>
    %c0_54 = arith.constant 0 : index
    %c0_55 = arith.constant 0 : index
    %120 = vector.load %arg9[%c0_54, %c0_55] : memref<8x32xf32, #tpu.memory_space<vmem>>, vector<8x32xf32>
    tpu.vector_store %arg9[%c0_54, %c0_55], %117 {strides = array<i32>} : memref<8x32xf32, #tpu.memory_space<vmem>>, vector<8x32xf32>,
    %121 = vector.extract_strided_slice %119 {offsets = [0, 0], sizes = [4, 32], strides = [1, 1]} : vector<8x32xf32> to vector<4x32xf32>
    %c0_56 = arith.constant 0 : index
    %c0_57 = arith.constant 0 : index
    %122 = vector.load %arg8[%c0_56, %c0_57] : memref<8x64xf32, #tpu.memory_space<vmem>>, vector<4x32xf32>
    tpu.vector_store %arg8[%c0_56, %c0_57], %121 {strides = array<i32>} : memref<8x64xf32, #tpu.memory_space<vmem>>, vector<4x32xf32>,
    %123 = vector.extract_strided_slice %119 {offsets = [4, 0], sizes = [4, 32], strides = [1, 1]} : vector<8x32xf32> to vector<4x32xf32>
    %c4_58 = arith.constant 4 : index
    %c32_59 = arith.constant 32 : index
    %124 = vector.load %arg8[%c4_58, %c32_59] : memref<8x64xf32, #tpu.memory_space<vmem>>, vector<4x32xf32>
    tpu.vector_store %arg8[%c4_58, %c32_59], %123 {strides = array<i32>} : memref<8x64xf32, #tpu.memory_space<vmem>>, vector<4x32xf32>,
    %125 = vector.extract_strided_slice %119 {offsets = [0, 0], sizes = [4, 32], strides = [1, 1]} : vector<8x32xf32> to vector<4x32xf32>
    %126 = arith.index_cast %c2_i32 : i32 to index
    %c0_60 = arith.constant 0 : index
    %c0_61 = arith.constant 0 : index
    %127 = vector.load %arg4[%126, %c0_60, %c0_61] : memref<4x4x32xf32, #tpu.memory_space<vmem>>, vector<1x4x32xf32>
    %128 = vector.shape_cast %127 : vector<1x4x32xf32> to vector<4x32xf32>
    %129 = vector.shape_cast %125 : vector<4x32xf32> to vector<1x4x32xf32>
    tpu.vector_store %arg4[%126, %c0_60, %c0_61], %129 {strides = array<i32>} : memref<4x4x32xf32, #tpu.memory_space<vmem>>, vector<1x4x32xf32>,
    %130 = vector.extract_strided_slice %119 {offsets = [4, 0], sizes = [4, 32], strides = [1, 1]} : vector<8x32xf32> to vector<4x32xf32>
    %c3_i32_62 = arith.constant 3 : i32
    %131 = arith.subi %c3_i32_62, %c2_i32 : i32
    %132 = arith.index_cast %131 : i32 to index
    %c0_63 = arith.constant 0 : index
    %c0_64 = arith.constant 0 : index
    %133 = vector.load %arg5[%132, %c0_63, %c0_64] : memref<4x4x32xf32, #tpu.memory_space<vmem>>, vector<1x4x32xf32>
    %134 = vector.shape_cast %133 : vector<1x4x32xf32> to vector<4x32xf32>
    %135 = vector.shape_cast %130 : vector<4x32xf32> to vector<1x4x32xf32>
    tpu.vector_store %arg5[%132, %c0_63, %c0_64], %135 {strides = array<i32>} : memref<4x4x32xf32, #tpu.memory_space<vmem>>, vector<1x4x32xf32>,
    %c3_i32_65 = arith.constant 3 : i32
    %136 = arith.index_cast %c3_i32_65 : i32 to index
    %c0_66 = arith.constant 0 : index
    %c0_67 = arith.constant 0 : index
    %137 = vector.load %arg1[%136, %c0_66, %c0_67] : memref<4x4x128xf32, #tpu.memory_space<vmem>>, vector<1x4x128xf32>
    %138 = vector.shape_cast %137 : vector<1x4x128xf32> to vector<4x128xf32>
    %c3_i32_68 = arith.constant 3 : i32
    %139 = arith.subi %c3_i32_68, %c3_i32_65 : i32
    %140 = arith.index_cast %139 : i32 to index
    %c0_69 = arith.constant 0 : index
    %c0_70 = arith.constant 0 : index
    %141 = vector.load %arg2[%140, %c0_69, %c0_70] : memref<4x4x128xf32, #tpu.memory_space<vmem>>, vector<1x4x128xf32>
    %142 = vector.shape_cast %141 : vector<1x4x128xf32> to vector<4x128xf32>
    %143 = tpu.concatenate %138, %142 in 0 : vector<4x128xf32>, vector<4x128xf32> -> vector<8x128xf32>
    %c0_71 = arith.constant 0 : index
    %c0_72 = arith.constant 0 : index
    %144 = vector.load %arg8[%c0_71, %c0_72] : memref<8x64xf32, #tpu.memory_space<vmem>>, vector<8x64xf32>
    %cst_73 = arith.constant dense<0.000000e+00> : vector<8x128xf32>
    %145 = tpu.matmul %144, %3, %cst_73 {dimension_numbers = #tpu.dot_dimension_numbers<[1], [0], [0], [1], [0, 0, 1, 1], [], []>} : vector<8x64xf32>, vector<64x128xf32>, vector<8x128xf32> -> vector<8x128xf32>
    %146 = arith.addf %143, %145 : vector<8x128xf32>
    %147 = vector.extract_strided_slice %146 {offsets = [0, 0], sizes = [8, 96], strides = [1, 1]} : vector<8x128xf32> to vector<8x96xf32>
    %148 = arith.negf %147 : vector<8x96xf32>
    %149 = math.exp %148 : vector<8x96xf32>
    %cst_74 = arith.constant 1.000000e+00 : f32
    %150 = vector.broadcast %cst_74 : f32 to vector<8x96xf32>
    %151 = arith.addf %150, %149 : vector<8x96xf32>
    %152 = arith.divf %150, %151 : vector<8x96xf32>
    %153 = vector.extract_strided_slice %146 {offsets = [0, 96], sizes = [8, 32], strides = [1, 1]} : vector<8x128xf32> to vector<8x32xf32>
    %154 = math.tanh %153 : vector<8x32xf32>
    %155 = vector.extract_strided_slice %152 {offsets = [0, 0], sizes = [8, 32], strides = [1, 1]} : vector<8x96xf32> to vector<8x32xf32>
    %156 = vector.extract_strided_slice %152 {offsets = [0, 32], sizes = [8, 32], strides = [1, 1]} : vector<8x96xf32> to vector<8x32xf32>
    %157 = vector.extract_strided_slice %152 {offsets = [0, 64], sizes = [8, 32], strides = [1, 1]} : vector<8x96xf32> to vector<8x32xf32>
    %c0_75 = arith.constant 0 : index
    %c0_76 = arith.constant 0 : index
    %158 = vector.load %arg9[%c0_75, %c0_76] : memref<8x32xf32, #tpu.memory_space<vmem>>, vector<8x32xf32>
    %159 = arith.mulf %156, %158 : vector<8x32xf32>
    %160 = arith.mulf %155, %154 : vector<8x32xf32>
    %161 = arith.addf %159, %160 : vector<8x32xf32>
    %162 = math.tanh %161 : vector<8x32xf32>
    %163 = arith.mulf %157, %162 : vector<8x32xf32>
    %c0_77 = arith.constant 0 : index
    %c0_78 = arith.constant 0 : index
    %164 = vector.load %arg9[%c0_77, %c0_78] : memref<8x32xf32, #tpu.memory_space<vmem>>, vector<8x32xf32>
    tpu.vector_store %arg9[%c0_77, %c0_78], %161 {strides = array<i32>} : memref<8x32xf32, #tpu.memory_space<vmem>>, vector<8x32xf32>,
    %165 = vector.extract_strided_slice %163 {offsets = [0, 0], sizes = [4, 32], strides = [1, 1]} : vector<8x32xf32> to vector<4x32xf32>
    %c0_79 = arith.constant 0 : index
    %c0_80 = arith.constant 0 : index
    %166 = vector.load %arg8[%c0_79, %c0_80] : memref<8x64xf32, #tpu.memory_space<vmem>>, vector<4x32xf32>
    tpu.vector_store %arg8[%c0_79, %c0_80], %165 {strides = array<i32>} : memref<8x64xf32, #tpu.memory_space<vmem>>, vector<4x32xf32>,
    %167 = vector.extract_strided_slice %163 {offsets = [4, 0], sizes = [4, 32], strides = [1, 1]} : vector<8x32xf32> to vector<4x32xf32>
    %c4_81 = arith.constant 4 : index
    %c32_82 = arith.constant 32 : index
    %168 = vector.load %arg8[%c4_81, %c32_82] : memref<8x64xf32, #tpu.memory_space<vmem>>, vector<4x32xf32>
    tpu.vector_store %arg8[%c4_81, %c32_82], %167 {strides = array<i32>} : memref<8x64xf32, #tpu.memory_space<vmem>>, vector<4x32xf32>,
    %169 = vector.extract_strided_slice %163 {offsets = [0, 0], sizes = [4, 32], strides = [1, 1]} : vector<8x32xf32> to vector<4x32xf32>
    %170 = arith.index_cast %c3_i32_65 : i32 to index
    %c0_83 = arith.constant 0 : index
    %c0_84 = arith.constant 0 : index
    %171 = vector.load %arg4[%170, %c0_83, %c0_84] : memref<4x4x32xf32, #tpu.memory_space<vmem>>, vector<1x4x32xf32>
    %172 = vector.shape_cast %171 : vector<1x4x32xf32> to vector<4x32xf32>
    %173 = vector.shape_cast %169 : vector<4x32xf32> to vector<1x4x32xf32>
    tpu.vector_store %arg4[%170, %c0_83, %c0_84], %173 {strides = array<i32>} : memref<4x4x32xf32, #tpu.memory_space<vmem>>, vector<1x4x32xf32>,
    %174 = vector.extract_strided_slice %163 {offsets = [4, 0], sizes = [4, 32], strides = [1, 1]} : vector<8x32xf32> to vector<4x32xf32>
    %c3_i32_85 = arith.constant 3 : i32
    %175 = arith.subi %c3_i32_85, %c3_i32_65 : i32
    %176 = arith.index_cast %175 : i32 to index
    %c0_86 = arith.constant 0 : index
    %c0_87 = arith.constant 0 : index
    %177 = vector.load %arg5[%176, %c0_86, %c0_87] : memref<4x4x32xf32, #tpu.memory_space<vmem>>, vector<1x4x32xf32>
    %178 = vector.shape_cast %177 : vector<1x4x32xf32> to vector<4x32xf32>
    %179 = vector.shape_cast %174 : vector<4x32xf32> to vector<1x4x32xf32>
    tpu.vector_store %arg5[%176, %c0_86, %c0_87], %179 {strides = array<i32>} : memref<4x4x32xf32, #tpu.memory_space<vmem>>, vector<1x4x32xf32>,
    %c4_i32 = arith.constant 4 : i32
    %c1_i32_88 = arith.constant 1 : i32
    %180 = arith.cmpi eq, %arg0, %c1_i32_88 : i32
    %181 = arith.extui %180 : i1 to i32
    %c0_i32_89 = arith.constant 0 : i32
    %182 = arith.cmpi ne, %181, %c0_i32_89 : i32
    scf.if %182 {
      %c0_90 = arith.constant 0 : index
      %c0_91 = arith.constant 0 : index
      %183 = vector.load %arg8[%c0_90, %c0_91] : memref<8x64xf32, #tpu.memory_space<vmem>>, vector<4x64xf32>
      %c4_92 = arith.constant 4 : index
      %c0_93 = arith.constant 0 : index
      %184 = vector.load %arg8[%c4_92, %c0_93] : memref<8x64xf32, #tpu.memory_space<vmem>>, vector<4x64xf32>
      %185 = arith.addf %183, %184 : vector<4x64xf32>
      %c0_94 = arith.constant 0 : index
      %c0_95 = arith.constant 0 : index
      %186 = vector.load %arg6[%c0_94, %c0_95] : memref<4x64xf32, #tpu.memory_space<vmem>>, vector<4x64xf32>
      tpu.vector_store %arg6[%c0_94, %c0_95], %185 {strides = array<i32>} : memref<4x64xf32, #tpu.memory_space<vmem>>, vector<4x64xf32>,
      %c0_96 = arith.constant 0 : index
      %c0_97 = arith.constant 0 : index
      %187 = vector.load %arg9[%c0_96, %c0_97] : memref<8x32xf32, #tpu.memory_space<vmem>>, vector<4x32xf32>
      %c4_98 = arith.constant 4 : index
      %c0_99 = arith.constant 0 : index
      %188 = vector.load %arg9[%c4_98, %c0_99] : memref<8x32xf32, #tpu.memory_space<vmem>>, vector<4x32xf32>
      %189 = tpu.concatenate %187, %188 in 1 : vector<4x32xf32>, vector<4x32xf32> -> vector<4x64xf32>
      %c0_100 = arith.constant 0 : index
      %c0_101 = arith.constant 0 : index
      %190 = vector.load %arg7[%c0_100, %c0_101] : memref<4x64xf32, #tpu.memory_space<vmem>>, vector<4x64xf32>
      tpu.vector_store %arg7[%c0_100, %c0_101], %189 {strides = array<i32>} : memref<4x64xf32, #tpu.memory_space<vmem>>, vector<4x64xf32>,
    } else {
    }
    return
  }
  func.func @transform_0(%arg0: i32) -> (i32, i32, i32) {
    %c0_i32 = arith.constant 0 : i32
    %c0_i32_0 = arith.constant 0 : i32
    %c0_i32_1 = arith.constant 0 : i32
    return %arg0, %c0_i32, %c0_i32_0 : i32, i32, i32
  }
  func.func @transform_1(%arg0: i32) -> (i32, i32, i32) {
    %c1_i32 = arith.constant 1 : i32
    %0 = arith.subi %c1_i32, %arg0 : i32
    %c0_i32 = arith.constant 0 : i32
    %c0_i32_0 = arith.constant 0 : i32
    %c0_i32_1 = arith.constant 0 : i32
    return %0, %c0_i32, %c0_i32_0 : i32, i32, i32
  }
  func.func @transform_2(%arg0: i32) -> (i32, i32) {
    %c0_i32 = arith.constant 0 : i32
    %c0_i32_0 = arith.constant 0 : i32
    %c0_i32_1 = arith.constant 0 : i32
    return %c0_i32, %c0_i32_0 : i32, i32
  }
  func.func @transform_3(%arg0: i32) -> (i32, i32, i32) {
    %c0_i32 = arith.constant 0 : i32
    %c0_i32_0 = arith.constant 0 : i32
    %c0_i32_1 = arith.constant 0 : i32
    return %arg0, %c0_i32, %c0_i32_0 : i32, i32, i32
  }
  func.func @transform_4(%arg0: i32) -> (i32, i32, i32) {
    %c1_i32 = arith.constant 1 : i32
    %0 = arith.subi %c1_i32, %arg0 : i32
    %c0_i32 = arith.constant 0 : i32
    %c0_i32_0 = arith.constant 0 : i32
    %c0_i32_1 = arith.constant 0 : i32
    return %0, %c0_i32, %c0_i32_0 : i32, i32, i32
  }
  func.func @transform_5(%arg0: i32) -> (i32, i32) {
    %c0_i32 = arith.constant 0 : i32
    %c0_i32_0 = arith.constant 0 : i32
    %c0_i32_1 = arith.constant 0 : i32
    return %c0_i32, %c0_i32_0 : i32, i32
  }
  func.func @transform_6(%arg0: i32) -> (i32, i32) {
    %c0_i32 = arith.constant 0 : i32
    %c0_i32_0 = arith.constant 0 : i32
    %c0_i32_1 = arith.constant 0 : i32
    return %c0_i32, %c0_i32_0 : i32, i32
  }
}

</mosaic_0001>

<llo_original>
// kernel: _lambda_.2
$region0: #{_lambda_.2}
  #allocation0 [shape = 'u32[]', space=smem, size = 0x4, offset = 0x4, fixed_abs, tag = 'smem constant byte address 0x4 - core index']
  #allocation1 [shape = 'u32[144,128]{1,0:T(1,128)}', space=vmem, size = 0x12000, scoped, tag = 'internal scratch']
  #allocation2 [shape = 'f32[8,64]{1,0:T(8,128)}', space=vmem, size = 0x1000, scoped, tag = 'scratch operand']
  #allocation3 [shape = 'f32[8,32]{1,0:T(8,128)}', space=vmem, size = 0x1000, scoped, tag = 'scratch operand']
  %s0 = inlined_call_operand.vmem [shape: f32[8,4,128], index: 0, kind: input, shape index: {}]
  %s1 = inlined_call_operand.vmem [shape: f32[8,4,128], index: 1, kind: input, shape index: {}]
  %s2 = inlined_call_operand.vmem [shape: f32[64,128], index: 2, kind: input, shape index: {}]
  %s3 = inlined_call_operand.vmem [shape: f32[8,4,32], index: 3, kind: output, shape index: {0}]
  %s4 = inlined_call_operand.vmem [shape: f32[8,4,32], index: 4, kind: output, shape index: {1}]
  %s5 = inlined_call_operand.hbm [shape: f32[4,64], index: 5, kind: output, shape index: {2}]
  %s6 = inlined_call_operand.hbm [shape: f32[4,64], index: 6, kind: output, shape index: {3}]
  %7 = xla_tuple %s3, %s4, %s5, %s6
  %s8 = sld [smem:[#allocation0]]
  $region77: #{_lambda_.2} parent=0
    _
  %s10 = ssub.s32 1, %s8
  %s11 = scalar_select 0, %s10, %s8
  $region1: #{_lambda_.2} parent=0
    #allocation4 [shape = 'u8[2048]{0}', space=vmem, size = 0x800, scoped, tag = 'output window, operand 2, single buffered']
    #allocation5 [shape = 's32[2]{0}', space=sflag, size = 0x8, scoped, tag = 'scoped memory for _lambda_.2']
    #allocation6 [shape = 'u8[2048]{0}', space=vmem, size = 0x800, scoped, tag = 'output window, operand 3, single buffered']
    #allocation7 [shape = 's32[1]{0}', space=sflag, size = 0x4, scoped, tag = 'scoped memory for _lambda_.2']
    %12 = vsyncpa [#allocation5], 0
    %13 = vsyncpa [#allocation7], 0
    loop: start=0, step=1, limit=4
    $region2: #{_lambda_.2} parent=1 // loop_pre_header
      _
    $region3: #{_lambda_.2} parent=1 // loop_header
      %s15 = sphi 0, %s19
      %p16 = scmp.ge.s32.totalorder %s15, 4
      %s25 = sphi 0, %s27
      %s28 = sphi 0, %s25
      %s29 = sphi 0, %s28
      %s45 = sphi 0, %s29
      %s53 = sphi 0, %s55
      %s56 = sphi 0, %s53
      %s57 = sphi 0, %s56
      %s73 = sphi 0, %s57
      %s77 = sphi 0, %s77
      %s79 = sphi 0, %s77
      %s80 = sphi 0, %s79
      %s94 = sphi 0, %s80
      %s100 = sphi 0, %s102
      %s103 = sphi 0, %s100
      %s104 = sphi 0, %s103
      %s120 = sphi 0, %s104
      %s128 = sphi 0, %s130
      %s131 = sphi 0, %s128
      %s132 = sphi 0, %s131
      %s148 = sphi 0, %s132
      %s152 = sphi 0, %s152
      %s154 = sphi 0, %s152
      %s155 = sphi 0, %s154
      %s169 = sphi 0, %s155
      %s173 = sphi 0, %s173
      %s175 = sphi 0, %s173
      %s176 = sphi 0, %s175
      %s190 = sphi 0, %s176
    $region4: #{_lambda_.2} parent=1 // loop_header_branch
      %18 = sbr.rel (%p16) target = $region8
    $region5: #{_lambda_.2} parent=1 // loop_body
      %s20 = ssub.s32 %s15, 1
      %s21 = ssub.s32 %s15, 2
      %s22 = sadd.s32 %s15, 1
      %s23 = ssub.s32 %s15, %s22
      %p24 = scmp.eq.s32.totalorder %s23, 0
      %s26 = sadd.s32 %s25, 1
      %s27 = scalar_select %p24, %s25, %s26
      %p30 = pneg %p24
      %p31 = scmp.eq.s32.totalorder %s15, 1
      %p32 = por %p30, %p31
      %p33 = scmp.ne.s32.totalorder %s25, %s28
      %p34 = scmp.eq.s32.totalorder %s15, 0
      %p35 = por %p33, %p34
      %p36 = scmp.ne.s32.totalorder %s25, %s28
      %p37 = scmp.eq.s32.totalorder %s20, 1
      %p38 = por %p36, %p37
      %p39 = scmp.ne.s32.totalorder %s28, %s29
      %p40 = scmp.eq.s32.totalorder %s20, 0
      %p41 = por %p39, %p40
      %p42 = scmp.ne.s32.totalorder %s28, %s29
      %p43 = scmp.eq.s32.totalorder %s21, 1
      %p44 = por %p42, %p43
      %p46 = scmp.ne.s32.totalorder %s29, %s45
      %p47 = scmp.eq.s32.totalorder %s21, 0
      %p48 = por %p46, %p47
      %s49 = ssub.s32 1, %s15
      %s50 = ssub.s32 1, %s22
      %s51 = ssub.s32 %s49, %s50
      %p52 = scmp.eq.s32.totalorder %s51, 0
      %s54 = sadd.s32 %s53, 1
      %s55 = scalar_select %p52, %s53, %s54
      %p58 = pneg %p52
      %p59 = scmp.eq.s32.totalorder %s15, 1
      %p60 = por %p58, %p59
      %p61 = scmp.ne.s32.totalorder %s53, %s56
      %p62 = scmp.eq.s32.totalorder %s15, 0
      %p63 = por %p61, %p62
      %p64 = scmp.ne.s32.totalorder %s53, %s56
      %p65 = scmp.eq.s32.totalorder %s20, 1
      %p66 = por %p64, %p65
      %p67 = scmp.ne.s32.totalorder %s56, %s57
      %p68 = scmp.eq.s32.totalorder %s20, 0
      %p69 = por %p67, %p68
      %p70 = scmp.ne.s32.totalorder %s56, %s57
      %p71 = scmp.eq.s32.totalorder %s21, 1
      %p72 = por %p70, %p71
      %p74 = scmp.ne.s32.totalorder %s57, %s73
      %p75 = scmp.eq.s32.totalorder %s21, 0
      %p76 = por %p74, %p75
      %s78 = sadd.s32 %s77, 1
      %p81 = scmp.eq.s32.totalorder %s15, 1
      %p82 = scmp.ne.s32.totalorder %s77, %s79
      %p83 = scmp.eq.s32.totalorder %s15, 0
      %p84 = por %p82, %p83
      %p85 = scmp.ne.s32.totalorder %s77, %s79
      %p86 = scmp.eq.s32.totalorder %s20, 1
      %p87 = por %p85, %p86
      %p88 = scmp.ne.s32.totalorder %s79, %s80
      %p89 = scmp.eq.s32.totalorder %s20, 0
      %p90 = por %p88, %p89
      %p91 = scmp.ne.s32.totalorder %s79, %s80
      %p92 = scmp.eq.s32.totalorder %s21, 1
      %p93 = por %p91, %p92
      %p95 = scmp.ne.s32.totalorder %s80, %s94
      %p96 = scmp.eq.s32.totalorder %s21, 0
      %p97 = por %p95, %p96
      %s98 = ssub.s32 %s15, %s22
      %p99 = scmp.eq.s32.totalorder %s98, 0
      %s101 = sadd.s32 %s100, 1
      %s102 = scalar_select %p99, %s100, %s101
      %p105 = pneg %p99
      %p106 = scmp.eq.s32.totalorder %s15, 1
      %p107 = por %p105, %p106
      %p108 = scmp.ne.s32.totalorder %s100, %s103
      %p109 = scmp.eq.s32.totalorder %s15, 0
      %p110 = por %p108, %p109
      %p111 = scmp.ne.s32.totalorder %s100, %s103
      %p112 = scmp.eq.s32.totalorder %s20, 1
      %p113 = por %p111, %p112
      %p114 = scmp.ne.s32.totalorder %s103, %s104
      %p115 = scmp.eq.s32.totalorder %s20, 0
      %p116 = por %p114, %p115
      %p117 = scmp.ne.s32.totalorder %s103, %s104
      %p118 = scmp.eq.s32.totalorder %s21, 1
      %p119 = por %p117, %p118
      %p121 = scmp.ne.s32.totalorder %s104, %s120
      %p122 = scmp.eq.s32.totalorder %s21, 0
      %p123 = por %p121, %p122
      %s124 = ssub.s32 1, %s15
      %s125 = ssub.s32 1, %s22
      %s126 = ssub.s32 %s124, %s125
      %p127 = scmp.eq.s32.totalorder %s126, 0
      %s129 = sadd.s32 %s128, 1
      %s130 = scalar_select %p127, %s128, %s129
      %p133 = pneg %p127
      %p134 = scmp.eq.s32.totalorder %s15, 1
      %p135 = por %p133, %p134
      %p136 = scmp.ne.s32.totalorder %s128, %s131
      %p137 = scmp.eq.s32.totalorder %s15, 0
      %p138 = por %p136, %p137
      %p139 = scmp.ne.s32.totalorder %s128, %s131
      %p140 = scmp.eq.s32.totalorder %s20, 1
      %p141 = por %p139, %p140
      %p142 = scmp.ne.s32.totalorder %s131, %s132
      %p143 = scmp.eq.s32.totalorder %s20, 0
      %p144 = por %p142, %p143
      %p145 = scmp.ne.s32.totalorder %s131, %s132
      %p146 = scmp.eq.s32.totalorder %s21, 1
      %p147 = por %p145, %p146
      %p149 = scmp.ne.s32.totalorder %s132, %s148
      %p150 = scmp.eq.s32.totalorder %s21, 0
      %p151 = por %p149, %p150
      %s153 = sadd.s32 %s152, 1
      %p156 = scmp.eq.s32.totalorder %s15, 1
      %p157 = scmp.ne.s32.totalorder %s152, %s154
      %p158 = scmp.eq.s32.totalorder %s15, 0
      %p159 = por %p157, %p158
      %p160 = scmp.ne.s32.totalorder %s152, %s154
      %p161 = scmp.eq.s32.totalorder %s20, 1
      %p162 = por %p160, %p161
      %p163 = scmp.ne.s32.totalorder %s154, %s155
      %p164 = scmp.eq.s32.totalorder %s20, 0
      %p165 = por %p163, %p164
      %p166 = scmp.ne.s32.totalorder %s154, %s155
      %p167 = scmp.eq.s32.totalorder %s21, 1
      %p168 = por %p166, %p167
      %p170 = scmp.ne.s32.totalorder %s155, %s169
      %p171 = scmp.eq.s32.totalorder %s21, 0
      %p172 = por %p170, %p171
      %s174 = sadd.s32 %s173, 1
      %p177 = scmp.eq.s32.totalorder %s15, 1
      %p178 = scmp.ne.s32.totalorder %s173, %s175
      %p179 = scmp.eq.s32.totalorder %s15, 0
      %p180 = por %p178, %p179
      %p181 = scmp.ne.s32.totalorder %s173, %s175
      %p182 = scmp.eq.s32.totalorder %s20, 1
      %p183 = por %p181, %p182
      %p184 = scmp.ne.s32.totalorder %s175, %s176
      %p185 = scmp.eq.s32.totalorder %s20, 0
      %p186 = por %p184, %p185
      %p187 = scmp.ne.s32.totalorder %s175, %s176
      %p188 = scmp.eq.s32.totalorder %s21, 1
      %p189 = por %p187, %p188
      %p191 = scmp.ne.s32.totalorder %s176, %s190
      %p192 = scmp.eq.s32.totalorder %s21, 0
      %p193 = por %p191, %p192
      %p194 = scmp.le.s32.totalorder 1, %s15
      %p195 = scmp.lt.s32.totalorder %s15, 3
      %p196 = pnand %p194, %p195
      %p197 = pneg %p196
      // Predicated region
      $region9: #{_lambda_.2} parent=5 // pred_check
        _
      $region10: #{_lambda_.2} parent=5 // pred_check_branch
        %199 = sbr.rel (%p196) target = $region12
      $region11: #{_lambda_.2} parent=5 // pred_region
        %s200 = ssub.s32 %s15, 1
        // Predicated region
        $region13: #{_lambda_.2} parent=11 // pred_check
          %p201 = pneg %p90
        $region14: #{_lambda_.2} parent=11 // pred_check_branch
          %203 = sbr.rel (%p201) target = $region16
        $region15: #{_lambda_.2} parent=11 // pred_region
          _
        $region16: #{_lambda_.2} parent=11 // pred_fallthru
          _
      $region12: #{_lambda_.2} parent=5 // pred_fallthru
        _
      %p204 = scmp.lt.s32.totalorder %s15, 2
      // Predicated region
      $region17: #{_lambda_.2} parent=5 // pred_check
        %p205 = pneg %p204
      $region18: #{_lambda_.2} parent=5 // pred_check_branch
        %207 = sbr.rel (%p205) target = $region20
      $region19: #{_lambda_.2} parent=5 // pred_region
        // Predicated region
        $region21: #{_lambda_.2} parent=19 // pred_check
          %p208 = pneg %p35
        $region22: #{_lambda_.2} parent=19 // pred_check_branch
          %210 = sbr.rel (%p208) target = $region24
        $region23: #{_lambda_.2} parent=19 // pred_region
          %s211 = smul.u32 4, %s15
          %p212 = scmp.lt.s32.totalorder %s211, 7
          %s213 = scalar_select %p212, %s211, 7
          %s214 = smul.addr %s213, 4
          %s215 = scalar_lea.vmem %s0, %s214
          %s216 = smul.u32 4, %s15
        $region24: #{_lambda_.2} parent=19 // pred_fallthru
          _
        // Predicated region
        $region25: #{_lambda_.2} parent=19 // pred_check
          %p217 = pneg %p63
        $region26: #{_lambda_.2} parent=19 // pred_check_branch
          %219 = sbr.rel (%p217) target = $region28
        $region27: #{_lambda_.2} parent=19 // pred_region
          %s220 = ssub.s32 1, %s15
          %s221 = smul.u32 4, %s220
          %p222 = scmp.lt.s32.totalorder %s221, 7
          %s223 = scalar_select %p222, %s221, 7
          %s224 = smul.addr %s223, 4
          %s225 = scalar_lea.vmem %s1, %s224
          %s226 = ssub.s32 1, %s15
          %s227 = smul.u32 4, %s226
        $region28: #{_lambda_.2} parent=19 // pred_fallthru
          _
      $region20: #{_lambda_.2} parent=5 // pred_fallthru
        _
      %p228 = scmp.le.s32.totalorder 1, %s15
      %p229 = scmp.lt.s32.totalorder %s15, 3
      %p230 = pnand %p228, %p229
      %p231 = pneg %p230
      // Predicated region
      $region29: #{_lambda_.2} parent=5 // pred_check
        _
      $region30: #{_lambda_.2} parent=5 // pred_check_branch
        %233 = sbr.rel (%p230) target = $region32
      $region31: #{_lambda_.2} parent=5 // pred_region
        %s234 = ssub.s32 %s15, 1
        %s235 = smul.u32 4, %s20
        %p236 = scmp.lt.s32.totalorder %s235, 7
        %s237 = scalar_select %p236, %s235, 7
        %s238 = smul.addr %s237, 4
        %s239 = scalar_lea.vmem %s0, %s238
        %p240 = pneg %p41
        %p241 = pneg %p38
        %s242 = ssub.s32 1, %s20
        %s243 = smul.u32 4, %s242
        %p244 = scmp.lt.s32.totalorder %s243, 7
        %s245 = scalar_select %p244, %s243, 7
        %s246 = smul.addr %s245, 4
        %s247 = scalar_lea.vmem %s1, %s246
        %p248 = pneg %p69
        %p249 = pneg %p66
        %p250 = pneg %p90
        %p251 = pneg %p87
        %p252 = pneg %p116
        %p253 = pneg %p113
        %s254 = smul.u32 4, %s20
        %p255 = scmp.lt.s32.totalorder %s254, 7
        %s256 = scalar_select %p255, %s254, 7
        %s257 = smul.addr %s256, 4
        %s258 = scalar_lea.vmem %s3, %s257
        %p259 = pneg %p144
        %p260 = pneg %p141
        %s261 = ssub.s32 1, %s20
        %s262 = smul.u32 4, %s261
        %p263 = scmp.lt.s32.totalorder %s262, 7
        %s264 = scalar_select %p263, %s262, 7
        %s265 = smul.addr %s264, 4
        %s266 = scalar_lea.vmem %s4, %s265
        %p267 = pneg %p165
        %p268 = pneg %p162
        %p269 = pneg %p186
        %p270 = pneg %p183
        %s271 = smul.u32 4, %s20
        %p272 = scmp.lt.s32.totalorder %s271, 7
        %s273 = scalar_select %p272, %s271, 7
        %s274 = smul.addr %s273, 4
        %s275 = scalar_lea.vmem %s0, %s274
        %s276 = smul.u32 4, %s20
        %s277 = ssub.s32 1, %s20
        %s278 = smul.u32 4, %s277
        %p279 = scmp.lt.s32.totalorder %s278, 7
        %s280 = scalar_select %p279, %s278, 7
        %s281 = smul.addr %s280, 4
        %s282 = scalar_lea.vmem %s1, %s281
        %s283 = ssub.s32 1, %s20
        %s284 = smul.u32 4, %s283
        %s285 = smul.u32 4, %s20
        %p286 = scmp.lt.s32.totalorder %s285, 7
        %s287 = scalar_select %p286, %s285, 7
        %s288 = smul.addr %s287, 4
        %s289 = scalar_lea.vmem %s3, %s288
        %s290 = smul.u32 4, %s20
        %s291 = ssub.s32 1, %s20
        %s292 = smul.u32 4, %s291
        %p293 = scmp.lt.s32.totalorder %s292, 7
        %s294 = scalar_select %p293, %s292, 7
        %s295 = smul.addr %s294, 4
        %s296 = scalar_lea.vmem %s4, %s295
        %s297 = ssub.s32 1, %s20
        %s298 = smul.u32 4, %s297
        %p299 = scmp.eq.s32.totalorder %s20, 0
        // Predicated region
        $region33: #{_lambda_.2} parent=31 // pred_check
          %p300 = pneg %p299
        $region34: #{_lambda_.2} parent=31 // pred_check_branch
          %302 = sbr.rel (%p300) target = $region36
        $region35: #{_lambda_.2} parent=31 // pred_region
          %vm303 = vcmask 523264
          %304 = vst.msk [vmem:[#allocation2] sm:$0xff] %vm303, 0.0
          %vm305 = vcmask 261120
          %306 = vst.msk [vmem:[#allocation3] sm:$0xff] %vm305, 0.0
        $region36: #{_lambda_.2} parent=31 // pred_fallthru
          _
        %v307 = vld [vmem:[%s2] sm:$0xff]
        %v308 = vld [vmem:[%s2 + $0x8] sm:$0xff]
        %v309 = vld [vmem:[%s2 + $0x10] sm:$0xff]
        %v310 = vld [vmem:[%s2 + $0x18] sm:$0xff]
        %v311 = vld [vmem:[%s2 + $0x20] sm:$0xff]
        %v312 = vld [vmem:[%s2 + $0x28] sm:$0xff]
        %v313 = vld [vmem:[%s2 + $0x30] sm:$0xff]
        %v314 = vld [vmem:[%s2 + $0x38] sm:$0xff]
        %v315 = vld [vmem:[%s275] sm:$0xf]
        %s316 = scalar_lea.vmem %s282, 12
        %v317 = vld [vmem:[%s316] sm:$0xf]
        %v319 = vrot.slane %v317, 4
        %vm321 = vcmask 1043456
        %v322 = vsel %vm321, %v315, %v319
        %v323 = vld [vmem:[#allocation2] sm:$0xff]
        %vm324 = vcmask 523264
        %v326 = vsel %vm324, %v323, 0
        %328 = vmatprep.subr.mxu0 0.0
        %329 = vmatpush1.msra.mxu0 %v307
        %330 = vmatprep.subr.mxu0 0.0
        %331 = vmatpush1.msra.mxu0 %v308
        %332 = vmatprep.subr.mxu0 0.0
        %333 = vmatpush1.msra.mxu0 %v309
        %334 = vmatprep.subr.mxu0 0.0
        %335 = vmatpush1.msra.mxu0 %v310
        %336 = vmatprep.subr.mxu0 0.0
        %337 = vmatpush1.msra.mxu0 %v311
        %338 = vmatprep.subr.mxu0 0.0
        %339 = vmatpush1.msra.mxu0 %v312
        %340 = vmatprep.subr.mxu0 0.0
        %341 = vmatpush1.msra.mxu0 %v313
        %342 = vmatprep.subr.mxu0 0.0
        %343 = vmatpush1.msra.mxu0 %v314
        %344 = vmatprep.subr.mxu0 0.0
        %345 = vmatpush1.msra.mxu0 0.0
        %346 = vmatprep.subr.mxu0 0.0
        %347 = vmatpush1.msra.mxu0 0.0
        %348 = vmatprep.subr.mxu0 0.0
        %349 = vmatpush1.msra.mxu0 0.0
        %350 = vmatprep.subr.mxu0 0.0
        %351 = vmatpush1.msra.mxu0 0.0
        %352 = vmatprep.subr.mxu0 0.0
        %353 = vmatpush1.msra.mxu0 0.0
        %354 = vmatprep.subr.mxu0 0.0
        %355 = vmatpush1.msra.mxu0 0.0
        %356 = vmatprep.subr.mxu0 0.0
        %357 = vmatpush1.msra.mxu0 0.0
        %358 = vmatprep.subr.mxu0 0.0
        %359 = vmatpush1.msra.mxu0 0.0
        %360 = vmatprep.subr.mxu0 0.0
        %361 = vmatpush1.msra.mxu0 0.0
        %362 = vmatprep.subr.mxu0 0.0
        %363 = vmatpush1.msra.mxu0 0.0
        %364 = vmatprep.subr.mxu0 0.0
        %365 = vmatpush1.msra.mxu0 0.0
        %366 = vmatprep.subr.mxu0 0.0
        %367 = vmatpush1.msra.mxu0 0.0
        %368 = vmatprep.subr.mxu0 0.0
        %369 = vmatpush1.msra.mxu0 0.0
        %370 = vmatprep.subr.mxu0 0.0
        %371 = vmatpush1.msra.mxu0 0.0
        %372 = vmatprep.subr.mxu0 0.0
        %373 = vmatpush1.msra.mxu0 0.0
        %374 = vmatprep.subr.mxu0 0.0
        %375 = vmatpush1.msra.mxu0 0.0
        %376 = vmatprep.subr.mxu0 0.0
        %377 = vmatpush1.msra.mxu0 0.0
        %378 = vmatprep.subr.mxu0 0.0
        %379 = vmatpush1.msra.mxu0 0.0
        %380 = vmatprep.subr.mxu0 0.0
        %381 = vmatpush1.msra.mxu0 0.0
        %382 = vmatprep.subr.mxu0 0.0
        %383 = vmatpush1.msra.mxu0 0.0
        %384 = vmatprep.subr.mxu0 0.0
        %385 = vmatpush1.msra.mxu0 0.0
        %386 = vmatprep.subr.mxu0 0.0
        %387 = vmatpush1.msra.mxu0 0.0
        %388 = vmatprep.subr.mxu0 0.0
        %389 = vmatpush1.msra.mxu0 0.0
        %390 = vmatprep.subr.mxu0 0.0
        %391 = vmatpush1.msra.mxu0 0.0
        %392 = vmatprep.mubr.f32.mxu0 0.0
        %393 = vmatmul.mubr.f32.gmra.mrb[0].mxu0 %v326
        %v394 = vpop.f32.mrb[0].mxu0
        %v395 = vadd.f32 0.0, %v394
        %v396 = vpop.f32.mrb[0].mxu0
        %397 = vdwg.mxu0
        %v398 = vadd.f32 %v322, %v395
        %v399 = vxor.u32 %v398, 2147483648
        %v400 = vmul.f32 %v399, 1.442695
        %v401 = vpow.pop %v400
        %v402 = vadd.f32 %v401, 1.0
        %v403 = vrcp.pop %v402
        %v404 = vmul.f32 1.0, %v403
        %v405 = vtanh.pop %v398
        %v406 = vld [vmem:[#allocation3] sm:$0xff]
        %408 = vrot.lane.b32.xlu0 %v406, 32
        %v409 = vpop.permute.xlu0 %408
        %v411 = vmul.f32 %v404, %v409
        %413 = vrot.lane.b32.xlu0 %v405, 32
        %v414 = vpop.permute.xlu0 %413
        %v416 = vmul.f32 %v404, %v414
        %418 = vrot.lane.b32.xlu0 %v416, 32
        %v419 = vpop.permute.xlu0 %418
        %v421 = vadd.f32 %v411, %v419
        %v422 = vtanh.pop %v421
        %424 = vrot.lane.b32.xlu0 %v422, 32
        %v425 = vpop.permute.xlu0 %424
        %v427 = vmul.f32 %v404, %v425
        %429 = vrot.lane.b32.xlu0 %v421, 96
        %v430 = vpop.permute.xlu0 %429
        %vm432 = vcmask 261120
        %433 = vst.msk [vmem:[#allocation3] sm:$0xff] %vm432, %v430
        %435 = vrot.lane.b32.xlu0 %v427, 64
        %v436 = vpop.permute.xlu0 %435
        %vm438 = vcmask 257024
        %439 = vst.msk [vmem:[#allocation2] sm:$0xf] %vm438, %v436
        %440 = vrot.lane.b32.xlu0 %v427, 96
        %v441 = vpop.permute.xlu0 %440
        %vm443 = vcmask 523524
        %444 = vst.msk [vmem:[#allocation2] sm:$0xf0] %vm443, %v441
        %445 = vst.msk [vmem:[%s289] sm:$0xf] %vm438, %v436
        %s446 = scalar_lea.vmem %s296, 12
        %vm447 = vcmask 261124
        %448 = vst.msk [vmem:[%s446 - $0x4] sm:$0xf0] %vm447, %v436
        %s449 = scalar_lea.vmem %s275, 4
        %v450 = vld [vmem:[%s449] sm:$0xf]
        %s451 = scalar_lea.vmem %s282, 8
        %v452 = vld [vmem:[%s451] sm:$0xf]
        %v454 = vrot.slane %v452, 4
        %v456 = vsel %vm321, %v450, %v454
        %v457 = vld [vmem:[#allocation2] sm:$0xff]
        %v459 = vsel %vm324, %v457, 0
        %461 = vmatprep.subr.mxu0 0.0
        %462 = vmatpush1.msra.mxu0 %v307
        %463 = vmatprep.subr.mxu0 0.0
        %464 = vmatpush1.msra.mxu0 %v308
        %465 = vmatprep.subr.mxu0 0.0
        %466 = vmatpush1.msra.mxu0 %v309
        %467 = vmatprep.subr.mxu0 0.0
        %468 = vmatpush1.msra.mxu0 %v310
        %469 = vmatprep.subr.mxu0 0.0
        %470 = vmatpush1.msra.mxu0 %v311
        %471 = vmatprep.subr.mxu0 0.0
        %472 = vmatpush1.msra.mxu0 %v312
        %473 = vmatprep.subr.mxu0 0.0
        %474 = vmatpush1.msra.mxu0 %v313
        %475 = vmatprep.subr.mxu0 0.0
        %476 = vmatpush1.msra.mxu0 %v314
        %477 = vmatprep.subr.mxu0 0.0
        %478 = vmatpush1.msra.mxu0 0.0
        %479 = vmatprep.subr.mxu0 0.0
        %480 = vmatpush1.msra.mxu0 0.0
        %481 = vmatprep.subr.mxu0 0.0
        %482 = vmatpush1.msra.mxu0 0.0
        %483 = vmatprep.subr.mxu0 0.0
        %484 = vmatpush1.msra.mxu0 0.0
        %485 = vmatprep.subr.mxu0 0.0
        %486 = vmatpush1.msra.mxu0 0.0
        %487 = vmatprep.subr.mxu0 0.0
        %488 = vmatpush1.msra.mxu0 0.0
        %489 = vmatprep.subr.mxu0 0.0
        %490 = vmatpush1.msra.mxu0 0.0
        %491 = vmatprep.subr.mxu0 0.0
        %492 = vmatpush1.msra.mxu0 0.0
        %493 = vmatprep.subr.mxu0 0.0
        %494 = vmatpush1.msra.mxu0 0.0
        %495 = vmatprep.subr.mxu0 0.0
        %496 = vmatpush1.msra.mxu0 0.0
        %497 = vmatprep.subr.mxu0 0.0
        %498 = vmatpush1.msra.mxu0 0.0
        %499 = vmatprep.subr.mxu0 0.0
        %500 = vmatpush1.msra.mxu0 0.0
        %501 = vmatprep.subr.mxu0 0.0
        %502 = vmatpush1.msra.mxu0 0.0
        %503 = vmatprep.subr.mxu0 0.0
        %504 = vmatpush1.msra.mxu0 0.0
        %505 = vmatprep.subr.mxu0 0.0
        %506 = vmatpush1.msra.mxu0 0.0
        %507 = vmatprep.subr.mxu0 0.0
        %508 = vmatpush1.msra.mxu0 0.0
        %509 = vmatprep.subr.mxu0 0.0
        %510 = vmatpush1.msra.mxu0 0.0
        %511 = vmatprep.subr.mxu0 0.0
        %512 = vmatpush1.msra.mxu0 0.0
        %513 = vmatprep.subr.mxu0 0.0
        %514 = vmatpush1.msra.mxu0 0.0
        %515 = vmatprep.subr.mxu0 0.0
        %516 = vmatpush1.msra.mxu0 0.0
        %517 = vmatprep.subr.mxu0 0.0
        %518 = vmatpush1.msra.mxu0 0.0
        %519 = vmatprep.subr.mxu0 0.0
        %520 = vmatpush1.msra.mxu0 0.0
        %521 = vmatprep.subr.mxu0 0.0
        %522 = vmatpush1.msra.mxu0 0.0
        %523 = vmatprep.subr.mxu0 0.0
        %524 = vmatpush1.msra.mxu0 0.0
        %525 = vmatprep.mubr.f32.mxu0 0.0
        %526 = vmatmul.mubr.f32.gmra.mrb[0].mxu0 %v459
        %v527 = vpop.f32.mrb[0].mxu0
        %v528 = vadd.f32 0.0, %v527
        %v529 = vpop.f32.mrb[0].mxu0
        %530 = vdwg.mxu0
        %v531 = vadd.f32 %v456, %v528
        %v532 = vxor.u32 %v531, 2147483648
        %v533 = vmul.f32 %v532, 1.442695
        %v534 = vpow.pop %v533
        %v535 = vadd.f32 %v534, 1.0
        %v536 = vrcp.pop %v535
        %v537 = vmul.f32 1.0, %v536
        %v538 = vtanh.pop %v531
        %v539 = vld [vmem:[#allocation3] sm:$0xff]
        %541 = vrot.lane.b32.xlu0 %v539, 32
        %v542 = vpop.permute.xlu0 %541
        %v544 = vmul.f32 %v537, %v542
        %546 = vrot.lane.b32.xlu0 %v538, 32
        %v547 = vpop.permute.xlu0 %546
        %v549 = vmul.f32 %v537, %v547
        %551 = vrot.lane.b32.xlu0 %v549, 32
        %v552 = vpop.permute.xlu0 %551
        %v554 = vadd.f32 %v544, %v552
        %v555 = vtanh.pop %v554
        %557 = vrot.lane.b32.xlu0 %v555, 32
        %v558 = vpop.permute.xlu0 %557
        %v560 = vmul.f32 %v537, %v558
        %562 = vrot.lane.b32.xlu0 %v554, 96
        %v563 = vpop.permute.xlu0 %562
        %565 = vst.msk [vmem:[#allocation3] sm:$0xff] %vm432, %v563
        %567 = vrot.lane.b32.xlu0 %v560, 64
        %v568 = vpop.permute.xlu0 %567
        %570 = vst.msk [vmem:[#allocation2] sm:$0xf] %vm438, %v568
        %571 = vrot.lane.b32.xlu0 %v560, 96
        %v572 = vpop.permute.xlu0 %571
        %574 = vst.msk [vmem:[#allocation2] sm:$0xf0] %vm443, %v572
        %s575 = scalar_lea.vmem %s289, 4
        %576 = vst.msk [vmem:[%s575] sm:$0xf] %vm438, %v568
        %s577 = scalar_lea.vmem %s296, 8
        %578 = vst.msk [vmem:[%s577 - $0x4] sm:$0xf0] %vm447, %v568
        %s579 = scalar_lea.vmem %s275, 8
        %v580 = vld [vmem:[%s579] sm:$0xf]
        %s581 = scalar_lea.vmem %s282, 4
        %v582 = vld [vmem:[%s581] sm:$0xf]
        %v584 = vrot.slane %v582, 4
        %v586 = vsel %vm321, %v580, %v584
        %v587 = vld [vmem:[#allocation2] sm:$0xff]
        %v589 = vsel %vm324, %v587, 0
        %591 = vmatprep.subr.mxu0 0.0
        %592 = vmatpush1.msra.mxu0 %v307
        %593 = vmatprep.subr.mxu0 0.0
        %594 = vmatpush1.msra.mxu0 %v308
        %595 = vmatprep.subr.mxu0 0.0
        %596 = vmatpush1.msra.mxu0 %v309
        %597 = vmatprep.subr.mxu0 0.0
        %598 = vmatpush1.msra.mxu0 %v310
        %599 = vmatprep.subr.mxu0 0.0
        %600 = vmatpush1.msra.mxu0 %v311
        %601 = vmatprep.subr.mxu0 0.0
        %602 = vmatpush1.msra.mxu0 %v312
        %603 = vmatprep.subr.mxu0 0.0
        %604 = vmatpush1.msra.mxu0 %v313
        %605 = vmatprep.subr.mxu0 0.0
        %606 = vmatpush1.msra.mxu0 %v314
        %607 = vmatprep.subr.mxu0 0.0
        %608 = vmatpush1.msra.mxu0 0.0
        %609 = vmatprep.subr.mxu0 0.0
        %610 = vmatpush1.msra.mxu0 0.0
        %611 = vmatprep.subr.mxu0 0.0
        %612 = vmatpush1.msra.mxu0 0.0
        %613 = vmatprep.subr.mxu0 0.0
        %614 = vmatpush1.msra.mxu0 0.0
        %615 = vmatprep.subr.mxu0 0.0
        %616 = vmatpush1.msra.mxu0 0.0
        %617 = vmatprep.subr.mxu0 0.0
        %618 = vmatpush1.msra.mxu0 0.0
        %619 = vmatprep.subr.mxu0 0.0
        %620 = vmatpush1.msra.mxu0 0.0
        %621 = vmatprep.subr.mxu0 0.0
        %622 = vmatpush1.msra.mxu0 0.0
        %623 = vmatprep.subr.mxu0 0.0
        %624 = vmatpush1.msra.mxu0 0.0
        %625 = vmatprep.subr.mxu0 0.0
        %626 = vmatpush1.msra.mxu0 0.0
        %627 = vmatprep.subr.mxu0 0.0
        %628 = vmatpush1.msra.mxu0 0.0
        %629 = vmatprep.subr.mxu0 0.0
        %630 = vmatpush1.msra.mxu0 0.0
        %631 = vmatprep.subr.mxu0 0.0
        %632 = vmatpush1.msra.mxu0 0.0
        %633 = vmatprep.subr.mxu0 0.0
        %634 = vmatpush1.msra.mxu0 0.0
        %635 = vmatprep.subr.mxu0 0.0
        %636 = vmatpush1.msra.mxu0 0.0
        %637 = vmatprep.subr.mxu0 0.0
        %638 = vmatpush1.msra.mxu0 0.0
        %639 = vmatprep.subr.mxu0 0.0
        %640 = vmatpush1.msra.mxu0 0.0
        %641 = vmatprep.subr.mxu0 0.0
        %642 = vmatpush1.msra.mxu0 0.0
        %643 = vmatprep.subr.mxu0 0.0
        %644 = vmatpush1.msra.mxu0 0.0
        %645 = vmatprep.subr.mxu0 0.0
        %646 = vmatpush1.msra.mxu0 0.0
        %647 = vmatprep.subr.mxu0 0.0
        %648 = vmatpush1.msra.mxu0 0.0
        %649 = vmatprep.subr.mxu0 0.0
        %650 = vmatpush1.msra.mxu0 0.0
        %651 = vmatprep.subr.mxu0 0.0
        %652 = vmatpush1.msra.mxu0 0.0
        %653 = vmatprep.subr.mxu0 0.0
        %654 = vmatpush1.msra.mxu0 0.0
        %655 = vmatprep.mubr.f32.mxu0 0.0
        %656 = vmatmul.mubr.f32.gmra.mrb[0].mxu0 %v589
        %v657 = vpop.f32.mrb[0].mxu0
        %v658 = vadd.f32 0.0, %v657
        %v659 = vpop.f32.mrb[0].mxu0
        %660 = vdwg.mxu0
        %v661 = vadd.f32 %v586, %v658
        %v662 = vxor.u32 %v661, 2147483648
        %v663 = vmul.f32 %v662, 1.442695
        %v664 = vpow.pop %v663
        %v665 = vadd.f32 %v664, 1.0
        %v666 = vrcp.pop %v665
        %v667 = vmul.f32 1.0, %v666
        %v668 = vtanh.pop %v661
        %v669 = vld [vmem:[#allocation3] sm:$0xff]
        %671 = vrot.lane.b32.xlu0 %v669, 32
        %v672 = vpop.permute.xlu0 %671
        %v674 = vmul.f32 %v667, %v672
        %676 = vrot.lane.b32.xlu0 %v668, 32
        %v677 = vpop.permute.xlu0 %676
        %v679 = vmul.f32 %v667, %v677
        %681 = vrot.lane.b32.xlu0 %v679, 32
        %v682 = vpop.permute.xlu0 %681
        %v684 = vadd.f32 %v674, %v682
        %v685 = vtanh.pop %v684
        %687 = vrot.lane.b32.xlu0 %v685, 32
        %v688 = vpop.permute.xlu0 %687
        %v690 = vmul.f32 %v667, %v688
        %692 = vrot.lane.b32.xlu0 %v684, 96
        %v693 = vpop.permute.xlu0 %692
        %695 = vst.msk [vmem:[#allocation3] sm:$0xff] %vm432, %v693
        %697 = vrot.lane.b32.xlu0 %v690, 64
        %v698 = vpop.permute.xlu0 %697
        %700 = vst.msk [vmem:[#allocation2] sm:$0xf] %vm438, %v698
        %701 = vrot.lane.b32.xlu0 %v690, 96
        %v702 = vpop.permute.xlu0 %701
        %704 = vst.msk [vmem:[#allocation2] sm:$0xf0] %vm443, %v702
        %s705 = scalar_lea.vmem %s289, 8
        %706 = vst.msk [vmem:[%s705] sm:$0xf] %vm438, %v698
        %s707 = scalar_lea.vmem %s296, 4
        %708 = vst.msk [vmem:[%s707 - $0x4] sm:$0xf0] %vm447, %v698
        %s709 = scalar_lea.vmem %s275, 12
        %v710 = vld [vmem:[%s709] sm:$0xf]
        %v711 = vld [vmem:[%s282] sm:$0xf]
        %v713 = vrot.slane %v711, 4
        %v715 = vsel %vm321, %v710, %v713
        %v716 = vld [vmem:[#allocation2] sm:$0xff]
        %v718 = vsel %vm324, %v716, 0
        %720 = vmatprep.subr.mxu0 0.0
        %721 = vmatpush1.msra.mxu0 %v307
        %722 = vmatprep.subr.mxu0 0.0
        %723 = vmatpush1.msra.mxu0 %v308
        %724 = vmatprep.subr.mxu0 0.0
        %725 = vmatpush1.msra.mxu0 %v309
        %726 = vmatprep.subr.mxu0 0.0
        %727 = vmatpush1.msra.mxu0 %v310
        %728 = vmatprep.subr.mxu0 0.0
        %729 = vmatpush1.msra.mxu0 %v311
        %730 = vmatprep.subr.mxu0 0.0
        %731 = vmatpush1.msra.mxu0 %v312
        %732 = vmatprep.subr.mxu0 0.0
        %733 = vmatpush1.msra.mxu0 %v313
        %734 = vmatprep.subr.mxu0 0.0
        %735 = vmatpush1.msra.mxu0 %v314
        %736 = vmatprep.subr.mxu0 0.0
        %737 = vmatpush1.msra.mxu0 0.0
        %738 = vmatprep.subr.mxu0 0.0
        %739 = vmatpush1.msra.mxu0 0.0
        %740 = vmatprep.subr.mxu0 0.0
        %741 = vmatpush1.msra.mxu0 0.0
        %742 = vmatprep.subr.mxu0 0.0
        %743 = vmatpush1.msra.mxu0 0.0
        %744 = vmatprep.subr.mxu0 0.0
        %745 = vmatpush1.msra.mxu0 0.0
        %746 = vmatprep.subr.mxu0 0.0
        %747 = vmatpush1.msra.mxu0 0.0
        %748 = vmatprep.subr.mxu0 0.0
        %749 = vmatpush1.msra.mxu0 0.0
        %750 = vmatprep.subr.mxu0 0.0
        %751 = vmatpush1.msra.mxu0 0.0
        %752 = vmatprep.subr.mxu0 0.0
        %753 = vmatpush1.msra.mxu0 0.0
        %754 = vmatprep.subr.mxu0 0.0
        %755 = vmatpush1.msra.mxu0 0.0
        %756 = vmatprep.subr.mxu0 0.0
        %757 = vmatpush1.msra.mxu0 0.0
        %758 = vmatprep.subr.mxu0 0.0
        %759 = vmatpush1.msra.mxu0 0.0
        %760 = vmatprep.subr.mxu0 0.0
        %761 = vmatpush1.msra.mxu0 0.0
        %762 = vmatprep.subr.mxu0 0.0
        %763 = vmatpush1.msra.mxu0 0.0
        %764 = vmatprep.subr.mxu0 0.0
        %765 = vmatpush1.msra.mxu0 0.0
        %766 = vmatprep.subr.mxu0 0.0
        %767 = vmatpush1.msra.mxu0 0.0
        %768 = vmatprep.subr.mxu0 0.0
        %769 = vmatpush1.msra.mxu0 0.0
        %770 = vmatprep.subr.mxu0 0.0
        %771 = vmatpush1.msra.mxu0 0.0
        %772 = vmatprep.subr.mxu0 0.0
        %773 = vmatpush1.msra.mxu0 0.0
        %774 = vmatprep.subr.mxu0 0.0
        %775 = vmatpush1.msra.mxu0 0.0
        %776 = vmatprep.subr.mxu0 0.0
        %777 = vmatpush1.msra.mxu0 0.0
        %778 = vmatprep.subr.mxu0 0.0
        %779 = vmatpush1.msra.mxu0 0.0
        %780 = vmatprep.subr.mxu0 0.0
        %781 = vmatpush1.msra.mxu0 0.0
        %782 = vmatprep.subr.mxu0 0.0
        %783 = vmatpush1.msra.mxu0 0.0
        %784 = vmatprep.mubr.f32.mxu0 0.0
        %785 = vmatmul.mubr.f32.gmra.mrb[0].mxu0 %v718
        %v786 = vpop.f32.mrb[0].mxu0
        %v787 = vadd.f32 0.0, %v786
        %v788 = vpop.f32.mrb[0].mxu0
        %789 = vdwg.mxu0
        %v790 = vadd.f32 %v715, %v787
        %v791 = vxor.u32 %v790, 2147483648
        %v792 = vmul.f32 %v791, 1.442695
        %v793 = vpow.pop %v792
        %v794 = vadd.f32 %v793, 1.0
        %v795 = vrcp.pop %v794
        %v796 = vmul.f32 1.0, %v795
        %v797 = vtanh.pop %v790
        %v798 = vld [vmem:[#allocation3] sm:$0xff]
        %800 = vrot.lane.b32.xlu0 %v798, 32
        %v801 = vpop.permute.xlu0 %800
        %v803 = vmul.f32 %v796, %v801
        %805 = vrot.lane.b32.xlu0 %v797, 32
        %v806 = vpop.permute.xlu0 %805
        %v808 = vmul.f32 %v796, %v806
        %810 = vrot.lane.b32.xlu0 %v808, 32
        %v811 = vpop.permute.xlu0 %810
        %v813 = vadd.f32 %v803, %v811
        %v814 = vtanh.pop %v813
        %816 = vrot.lane.b32.xlu0 %v814, 32
        %v817 = vpop.permute.xlu0 %816
        %v819 = vmul.f32 %v796, %v817
        %821 = vrot.lane.b32.xlu0 %v813, 96
        %v822 = vpop.permute.xlu0 %821
        %824 = vst.msk [vmem:[#allocation3] sm:$0xff] %vm432, %v822
        %826 = vrot.lane.b32.xlu0 %v819, 64
        %v827 = vpop.permute.xlu0 %826
        %829 = vst.msk [vmem:[#allocation2] sm:$0xf] %vm438, %v827
        %830 = vrot.lane.b32.xlu0 %v819, 96
        %v831 = vpop.permute.xlu0 %830
        %833 = vst.msk [vmem:[#allocation2] sm:$0xf0] %vm443, %v831
        %s834 = scalar_lea.vmem %s289, 12
        %835 = vst.msk [vmem:[%s834] sm:$0xf] %vm438, %v827
        %836 = vst.msk [vmem:[%s296 - $0x4] sm:$0xf0] %vm447, %v827
        %p837 = scmp.eq.s32.totalorder %s20, 1
        // Predicated region
        $region37: #{_lambda_.2} parent=31 // pred_check
          %p838 = pneg %p837
        $region38: #{_lambda_.2} parent=31 // pred_check_branch
          %840 = sbr.rel (%p838) target = $region40
        $region39: #{_lambda_.2} parent=31 // pred_region
          %v841 = vld [vmem:[#allocation2] sm:$0xf]
          %v842 = vld [vmem:[#allocation2 + $0x4] sm:$0xf]
          %v843 = vadd.f32 %v841, %v842
          %vm844 = vcmask 519168
          %845 = vst.msk [vmem:[#allocation4] sm:$0xf] %vm844, %v843
          %v846 = vld [vmem:[#allocation3] sm:$0xf]
          %v847 = vld [vmem:[#allocation3 + $0x4] sm:$0xf]
          %849 = vrot.lane.b32.xlu0 %v847, 32
          %v850 = vpop.permute.xlu0 %849
          %v852 = vsel %vm432, %v846, %v850
          %853 = vst.msk [vmem:[#allocation6] sm:$0xf] %vm844, %v852
        $region40: #{_lambda_.2} parent=31 // pred_fallthru
          _
        %s854 = smul.u32 4, %s20
        %p855 = scmp.lt.s32.totalorder %s854, 7
        %s856 = scalar_select %p855, %s854, 7
        %s857 = smul.addr %s856, 4
        %s858 = scalar_lea.vmem %s3, %s857
        %s859 = ssub.s32 1, %s20
        %s860 = smul.u32 4, %s859
        %p861 = scmp.lt.s32.totalorder %s860, 7
        %s862 = scalar_select %p861, %s860, 7
        %s863 = smul.addr %s862, 4
        %s864 = scalar_lea.vmem %s4, %s863
        // Predicated region
        $region41: #{_lambda_.2} parent=31 // pred_check
          %p865 = pneg %p113
        $region42: #{_lambda_.2} parent=31 // pred_check_branch
          %867 = sbr.rel (%p865) target = $region44
        $region43: #{_lambda_.2} parent=31 // pred_region
          %s868 = smul.u32 4, %s20
        $region44: #{_lambda_.2} parent=31 // pred_fallthru
          _
        // Predicated region
        $region45: #{_lambda_.2} parent=31 // pred_check
          %p869 = pneg %p141
        $region46: #{_lambda_.2} parent=31 // pred_check_branch
          %871 = sbr.rel (%p869) target = $region48
        $region47: #{_lambda_.2} parent=31 // pred_region
          %s872 = ssub.s32 1, %s20
          %s873 = smul.u32 4, %s872
        $region48: #{_lambda_.2} parent=31 // pred_fallthru
          _
        // Predicated region
        $region49: #{_lambda_.2} parent=31 // pred_check
          %p874 = pneg %p162
        $region50: #{_lambda_.2} parent=31 // pred_check_branch
          %876 = sbr.rel (%p874) target = $region52
        $region51: #{_lambda_.2} parent=31 // pred_region
          %s878 = ssub.s32 64, 64
          %879 = vsyncadd [#allocation5], %s878
          %s881 = sshll.u32 [#allocation4], 4
          %s882 = int_to_ptr.vmem [resolvable:$true] %s881
          %884 = dma.vmem_to_hbm [thread:$0]  %s882, 64, %s5, [#allocation5]
        $region52: #{_lambda_.2} parent=31 // pred_fallthru
          _
        // Predicated region
        $region53: #{_lambda_.2} parent=31 // pred_check
          %p885 = pneg %p183
        $region54: #{_lambda_.2} parent=31 // pred_check_branch
          %887 = sbr.rel (%p885) target = $region56
        $region55: #{_lambda_.2} parent=31 // pred_region
          %s889 = ssub.s32 64, 64
          %890 = vsyncadd [#allocation7], %s889
          %s892 = sshll.u32 [#allocation6], 4
          %s893 = int_to_ptr.vmem [resolvable:$true] %s892
          %895 = dma.vmem_to_hbm [thread:$0]  %s893, 64, %s6, [#allocation7]
        $region56: #{_lambda_.2} parent=31 // pred_fallthru
          _
        // Predicated region
        $region57: #{_lambda_.2} parent=31 // pred_check
          %p896 = pneg %p162
        $region58: #{_lambda_.2} parent=31 // pred_check_branch
          %898 = sbr.rel (%p896) target = $region60
        $region59: #{_lambda_.2} parent=31 // pred_region
          %899 = dma.done [#allocation5], 64
        $region60: #{_lambda_.2} parent=31 // pred_fallthru
          _
        // Predicated region
        $region61: #{_lambda_.2} parent=31 // pred_check
          %p900 = pneg %p183
        $region62: #{_lambda_.2} parent=31 // pred_check_branch
          %902 = sbr.rel (%p900) target = $region64
        $region63: #{_lambda_.2} parent=31 // pred_region
          %903 = dma.done [#allocation7], 64
        $region64: #{_lambda_.2} parent=31 // pred_fallthru
          _
      $region32: #{_lambda_.2} parent=5 // pred_fallthru
        _
      %p904 = scmp.le.s32.totalorder 2, %s15
      // Predicated region
      $region65: #{_lambda_.2} parent=5 // pred_check
        %p905 = pneg %p904
      $region66: #{_lambda_.2} parent=5 // pred_check_branch
        %907 = sbr.rel (%p905) target = $region68
      $region67: #{_lambda_.2} parent=5 // pred_region
        %s908 = ssub.s32 %s15, 2
        // Predicated region
        $region69: #{_lambda_.2} parent=67 // pred_check
          %p909 = pneg %p119
        $region70: #{_lambda_.2} parent=67 // pred_check_branch
          %911 = sbr.rel (%p909) target = $region72
        $region71: #{_lambda_.2} parent=67 // pred_region
          %s912 = smul.u32 4, %s21
          %p913 = scmp.lt.s32.totalorder %s912, 7
          %s914 = scalar_select %p913, %s912, 7
          %s915 = smul.addr %s914, 4
          %s916 = scalar_lea.vmem %s3, %s915
        $region72: #{_lambda_.2} parent=67 // pred_fallthru
          _
        // Predicated region
        $region73: #{_lambda_.2} parent=67 // pred_check
          %p917 = pneg %p147
        $region74: #{_lambda_.2} parent=67 // pred_check_branch
          %919 = sbr.rel (%p917) target = $region76
        $region75: #{_lambda_.2} parent=67 // pred_region
          %s920 = ssub.s32 1, %s21
          %s921 = smul.u32 4, %s920
          %p922 = scmp.lt.s32.totalorder %s921, 7
          %s923 = scalar_select %p922, %s921, 7
          %s924 = smul.addr %s923, 4
          %s925 = scalar_lea.vmem %s4, %s924
        $region76: #{_lambda_.2} parent=67 // pred_fallthru
          _
      $region68: #{_lambda_.2} parent=5 // pred_fallthru
        _
    $region6: #{_lambda_.2} parent=1 // loop_footer
      %s19 = sadd.s32 1, %s15
    $region7: #{_lambda_.2} parent=1 // loop_footer_branch
      %14 = sbr.rel target = $region3
    $region8: #{_lambda_.2} parent=1 // loop_exit
      _
    %926 = vsyncpa [#allocation5], 1
    %s927 = scalar_lea.sflag [#allocation5], 1
    %928 = vsyncpa %s927, 1
    %929 = vsyncpa [#allocation7], 1

</llo_original>
